<compile_context>
chip_gen: v6e
topology: v6e:2x2x1
jax: 0.10.0
libtpu: 0.0.40
codegen_flags: <defaults>
</compile_context>

<pallas_src>
import jax
import jax.numpy as jnp
from jax.experimental import pallas as pl
from jax.experimental.pallas import tpu as pltpu


def lstm_dense_kernel(x_ref, wih_ref, whh_ref, b_ref, wd_ref, bd_ref, out_ref,
                      xproj_ref):
    """LSTM recurrence + dense head in one invocation; time loop is internal.

    x_ref:     (T*Bp, E)  bf16  time-major flattened embeddings
    wih_ref:   (E, 4*Hp)  bf16  gate-padded, g-gate pre-scaled x2
    whh_ref:   (Hp, 4*Hp) bf16  gate-padded, g-gate pre-scaled x2
    b_ref:     (1, 4*Hp)  f32   gate-padded, g-gate pre-scaled x2
    wd_ref:    (1, Hp)    f32   dense weight as a row
    bd_ref:    (1, 1)     f32
    out_ref:   (Bp, 1)    f32
    xproj_ref: (T*Bp, 4*Hp) f32 VMEM scratch for the hoisted input projection
    """
    TB, _E = x_ref.shape
    Bp = out_ref.shape[0]
    T = TB // Bp
    Hp4 = whh_ref.shape[1]
    Hp = Hp4 // 4

    # ---- Hoisted input projection: ONE large MXU op, off the serial path ----
    xproj_ref[...] = (
        jnp.dot(x_ref[...], wih_ref[...], preferred_element_type=jnp.float32)
        + b_ref[...]
    )

    # Loaded once (outside the time loop).
    w_hh = whh_ref[...]                                   # (Hp, 4Hp) bf16
    w_d = wd_ref[...]                                     # (1, Hp)   f32
    b_d = bd_ref[...]                                     # (1, 1)    f32

    h0 = jnp.zeros((Bp, Hp), jnp.float32)
    c0 = jnp.zeros((Bp, Hp), jnp.float32)

    def step(t, carry):
        h, c = carry
        # Serial critical path per step: one (Bp,Hp)@(Hp,4Hp) MXU op + one add.
        row0 = pl.multiple_of(t * Bp, Bp)                 # sublane-aligned slice
        gates = xproj_ref[pl.ds(row0, Bp), :] + jnp.dot(
            h.astype(jnp.bfloat16), w_hh, preferred_element_type=jnp.float32)
        # One full-width sigmoid (single EUP pass). g-gate weights/bias were
        # pre-scaled by 2 in the wrapper, so tanh(x) == 2*sigmoid(2x) - 1.
        s = jax.nn.sigmoid(gates)                         # (Bp, 4Hp) f32
        i_g = s[:, 0 * Hp:1 * Hp]                         # lane-aligned (Hp = k*128)
        f_g = s[:, 1 * Hp:2 * Hp]
        g_g = 2.0 * s[:, 2 * Hp:3 * Hp] - 1.0
        o_g = s[:, 3 * Hp:4 * Hp]
        c_new = f_g * c + i_g * g_g
        h_new = o_g * jnp.tanh(c_new)
        return (h_new, c_new)

    # Short fixed trip count -> fully unrolled; h/c are loop-carried vreg values.
    h_T, _ = jax.lax.fori_loop(0, T, step, (h0, c0), unroll=True)

    # ---- Dense head: VPU multiply + lane reduce (no N=1 MXU matmul). ----
    # Dropout == identity in eval mode.
    out_ref[...] = jnp.sum(h_T * w_d, axis=-1, keepdims=True) + b_d


def ngram_eos_forward(x_tokens, params):
    emb = params["embedding"]      # (V, E)
    w_ih = params["w_ih"]          # (E, 4H)
    w_hh = params["w_hh"]          # (H, 4H)
    b = params["b"]                # (1, 4H) = b_ih + b_hh
    w_d = params["w_dense"]        # (H, 1)
    b_d = params["b_dense"]        # (1, 1)

    x_emb = jnp.take(emb, x_tokens, axis=0)               # (B, T, E) gather glue
    B, T, E = x_emb.shape
    H = w_hh.shape[0]

    SUBLANE, LANE = 8, 128
    Bp = ((B + SUBLANE - 1) // SUBLANE) * SUBLANE          # full sublane rows for MXU/vregs
    Hp = ((H + LANE - 1) // LANE) * LANE                   # lane-aligned gate blocks

    if Bp != B:
        x_emb = jnp.pad(x_emb, ((0, Bp - B), (0, 0), (0, 0)))

    # Time-major, flattened to (T*Bp, E); bf16 MXU operands (f32 accumulation and
    # all gate/elementwise math stay f32 inside the kernel).
    x_seq = jnp.swapaxes(x_emb, 0, 1).reshape(T * Bp, E).astype(jnp.bfloat16)

    def prep_gate_weights(w, pad_rows_to=None):
        """Per-gate column padding H->Hp + g-gate x2 pre-scale (done in f32; exact)."""
        blocks = list(jnp.split(w, 4, axis=-1))            # [i, f, g, o], each (..., H)
        blocks[2] = blocks[2] * 2.0                        # tanh(x) = 2*sigmoid(2x) - 1
        pad_cfg = [(0, 0)] * (w.ndim - 1) + [(0, Hp - H)]
        w = jnp.concatenate([jnp.pad(blk, pad_cfg) for blk in blocks], axis=-1)
        if pad_rows_to is not None and pad_rows_to != w.shape[0]:
            w = jnp.pad(w, ((0, pad_rows_to - w.shape[0]), (0, 0)))
        return w

    w_ih_p = prep_gate_weights(w_ih).astype(jnp.bfloat16)                 # (E, 4Hp)
    w_hh_p = prep_gate_weights(w_hh, pad_rows_to=Hp).astype(jnp.bfloat16)  # (Hp, 4Hp)
    b_p = prep_gate_weights(b)                                            # (1, 4Hp) f32
    w_d_row = jnp.pad(w_d[:, 0][None, :], ((0, 0), (0, Hp - H)))          # (1, Hp)  f32

    out = pl.pallas_call(
        lstm_dense_kernel,
        out_shape=jax.ShapeDtypeStruct((Bp, 1), jnp.float32),
        grid=(1,),                                         # whole problem in one grid step
        in_specs=[
            pl.BlockSpec((T * Bp, E), lambda i: (0, 0)),
            pl.BlockSpec((E, 4 * Hp), lambda i: (0, 0)),
            pl.BlockSpec((Hp, 4 * Hp), lambda i: (0, 0)),
            pl.BlockSpec((1, 4 * Hp), lambda i: (0, 0)),
            pl.BlockSpec((1, Hp), lambda i: (0, 0)),
            pl.BlockSpec((1, 1), lambda i: (0, 0)),
        ],
        out_specs=pl.BlockSpec((Bp, 1), lambda i: (0, 0)),
        scratch_shapes=[pltpu.VMEM((T * Bp, 4 * Hp), jnp.float32)],   # hoisted x-projection
        compiler_params=pltpu.CompilerParams(
            dimension_semantics=("arbitrary",),
        ),
    )(x_seq, w_ih_p, w_hh_p, b_p, w_d_row, b_d)
    return out[:B, 0]                                      # drop batch padding -> (B,)


def ngram_eos_reference(x_tokens, params, matmul_dtype=jnp.float32):
    """Pure-JAX reference mirroring the PyTorch eval-mode forward.

    matmul_dtype controls the precision of the MXU operands only (accumulation
    and gate math stay f32), so bf16 reproduces the kernel's quantization.
    """
    emb = params["embedding"]
    w_ih = params["w_ih"].astype(matmul_dtype)
    w_hh = params["w_hh"].astype(matmul_dtype)
    b = params["b"]
    w_d = params["w_dense"].astype(matmul_dtype)
    b_d = params["b_dense"]
    x_emb = jnp.take(emb, x_tokens, axis=0).astype(matmul_dtype)
    B, T, E = x_emb.shape
    H = params["w_hh"].shape[0]

    def step(carry, x_t):
        h, c = carry
        gates = (jnp.dot(x_t, w_ih, preferred_element_type=jnp.float32)
                 + jnp.dot(h.astype(matmul_dtype), w_hh,
                           preferred_element_type=jnp.float32)
                 + b)
        i = jax.nn.sigmoid(gates[:, :H])
        f = jax.nn.sigmoid(gates[:, H:2 * H])
        g = jnp.tanh(gates[:, 2 * H:3 * H])
        o = jax.nn.sigmoid(gates[:, 3 * H:])
        c = f * c + i * g
        h = o * jnp.tanh(c)
        return (h, c), None

    (h, _), _ = jax.lax.scan(step,
                             (jnp.zeros((B, H), jnp.float32),
                              jnp.zeros((B, H), jnp.float32)),
                             jnp.swapaxes(x_emb, 0, 1))
    return (jnp.dot(h.astype(matmul_dtype), w_d,
                    preferred_element_type=jnp.float32) + b_d)[:, 0]


def make_params(key, vocab, E, H):
    """Deterministic synthetic parameters (PyTorch-like uniform(-1/sqrt(H), 1/sqrt(H)))."""
    k_emb, k_ih, k_hh, k_bi, k_bh, k_wd, k_bd = jax.random.split(key, 7)
    kscale = 1.0 / jnp.sqrt(jnp.float32(H))
    u = lambda k, shape: jax.random.uniform(k, shape, jnp.float32, -kscale, kscale)
    return {
        "embedding": jax.random.normal(k_emb, (vocab, E), jnp.float32),
        "w_ih": u(k_ih, (E, 4 * H)),
        "w_hh": u(k_hh, (H, 4 * H)),
        "b": (u(k_bi, (1, 4 * H)) + u(k_bh, (1, 4 * H))),
        "w_dense": u(k_wd, (H, 1)),
        "b_dense": u(k_bd, (1, 1)),
    }


if __name__ == "__main__":
    B, T = 2, 8
    VOCAB, E, H = 32, 32, 32

    key = jax.random.PRNGKey(0)
    k_tok, k_par = jax.random.split(key)
    params = make_params(k_par, VOCAB, E, H)
    x_tokens = jax.random.randint(k_tok, (B, T), 0, VOCAB, dtype=jnp.int32)

    logits = jax.jit(ngram_eos_forward)(x_tokens, params)
    logits = jax.block_until_ready(logits)
    assert logits.shape == (B,)

    # Tight check vs a reference that applies the SAME bf16 MXU-input quantization
    # (remaining diffs: f32 accumulation order + tanh via 2*sigmoid(2x)-1).
    ref_bf16 = ngram_eos_reference(x_tokens, params, matmul_dtype=jnp.bfloat16)
    assert jnp.allclose(logits, ref_bf16, atol=5e-3, rtol=5e-3), (logits, ref_bf16)

    # Loose sanity check vs the full-f32 reference (bf16 operand quantization cost).
    ref_f32 = ngram_eos_reference(x_tokens, params, matmul_dtype=jnp.float32)
    assert jnp.allclose(logits, ref_f32, atol=5e-2, rtol=5e-2), (logits, ref_f32)

    print("KERNEL_OK")
</pallas_src>

<mosaic_0001>
module attributes {stable_mosaic.version = 11 : i64} {
  func.func @lstm_dense_kernel(%arg0: i32, %arg1: memref<64x32xbf16, #tpu.memory_space<vmem>>, %arg2: memref<32x512xbf16, #tpu.memory_space<vmem>>, %arg3: memref<128x512xbf16, #tpu.memory_space<vmem>>, %arg4: memref<1x512xf32, #tpu.memory_space<vmem>>, %arg5: memref<1x128xf32, #tpu.memory_space<vmem>>, %arg6: memref<1x1xf32, #tpu.memory_space<vmem>>, %arg7: memref<8x1xf32, #tpu.memory_space<vmem>>, %arg8: memref<64x512xf32, #tpu.memory_space<vmem>>) attributes {dimension_semantics = [#tpu.dimension_semantics<arbitrary>], iteration_bounds = array<i64: 1>, scalar_prefetch = 0 : i64, scratch_operands = 1 : i64, tpu.core_type = #tpu.core_type<tc>, window_params = [{pipeline_mode = #tpu.pipeline_mode<synchronous>, transform_indices = @transform_0, window_bounds = array<i64: 64, 32>}, {pipeline_mode = #tpu.pipeline_mode<synchronous>, transform_indices = @transform_1, window_bounds = array<i64: 32, 512>}, {pipeline_mode = #tpu.pipeline_mode<synchronous>, transform_indices = @transform_2, window_bounds = array<i64: 128, 512>}, {pipeline_mode = #tpu.pipeline_mode<synchronous>, transform_indices = @transform_3, window_bounds = array<i64: 1, 512>}, {pipeline_mode = #tpu.pipeline_mode<synchronous>, transform_indices = @transform_4, window_bounds = array<i64: 1, 128>}, {pipeline_mode = #tpu.pipeline_mode<synchronous>, transform_indices = @transform_5, window_bounds = array<i64: 1, 1>}, {pipeline_mode = #tpu.pipeline_mode<synchronous>, transform_indices = @transform_6, window_bounds = array<i64: 8, 1>}]} {
    %c0 = arith.constant 0 : index
    %c0_0 = arith.constant 0 : index
    %0 = vector.load %arg1[%c0, %c0_0] : memref<64x32xbf16, #tpu.memory_space<vmem>>, vector<64x32xbf16>
    %c0_1 = arith.constant 0 : index
    %c0_2 = arith.constant 0 : index
    %1 = vector.load %arg2[%c0_1, %c0_2] : memref<32x512xbf16, #tpu.memory_space<vmem>>, vector<32x512xbf16>
    %cst = arith.constant dense<0.000000e+00> : vector<64x512xf32>
    %2 = tpu.matmul %0, %1, %cst {dimension_numbers = #tpu.dot_dimension_numbers<[1], [0], [0], [1], [0, 0, 1, 1], [], []>} : vector<64x32xbf16>, vector<32x512xbf16>, vector<64x512xf32> -> vector<64x512xf32>
    %c0_3 = arith.constant 0 : index
    %c0_4 = arith.constant 0 : index
    %3 = vector.load %arg4[%c0_3, %c0_4] : memref<1x512xf32, #tpu.memory_space<vmem>>, vector<1x512xf32>
    %4 = vector.broadcast %3 : vector<1x512xf32> to vector<64x512xf32>
    %5 = arith.addf %2, %4 : vector<64x512xf32>
    %c0_5 = arith.constant 0 : index
    %c0_6 = arith.constant 0 : index
    %6 = vector.load %arg8[%c0_5, %c0_6] : memref<64x512xf32, #tpu.memory_space<vmem>>, vector<64x512xf32>
    tpu.vector_store %arg8[%c0_5, %c0_6], %5 {strides = array<i32>} : memref<64x512xf32, #tpu.memory_space<vmem>>, vector<64x512xf32>,
    %c0_7 = arith.constant 0 : index
    %c0_8 = arith.constant 0 : index
    %7 = vector.load %arg3[%c0_7, %c0_8] : memref<128x512xbf16, #tpu.memory_space<vmem>>, vector<128x512xbf16>
    %c0_9 = arith.constant 0 : index
    %c0_10 = arith.constant 0 : index
    %8 = vector.load %arg5[%c0_9, %c0_10] : memref<1x128xf32, #tpu.memory_space<vmem>>, vector<1x128xf32>
    %c0_11 = arith.constant 0 : index
    %c0_12 = arith.constant 0 : index
    %9 = vector.load %arg6[%c0_11, %c0_12] : memref<1x1xf32, #tpu.memory_space<vmem>>, vector<1x1xf32>
    %cst_13 = arith.constant 0.000000e+00 : f32
    %10 = vector.broadcast %cst_13 : f32 to vector<8x128xf32>
    %cst_14 = arith.constant 0.000000e+00 : f32
    %11 = vector.broadcast %cst_14 : f32 to vector<8x128xf32>
    %c0_i32 = arith.constant 0 : i32
    %c8_i32 = arith.constant 8 : i32
    %12 = arith.muli %c0_i32, %c8_i32 : i32
    %13 = tpu.assume_multiple %12, 8 : i32
    %14 = arith.index_cast %13 : i32 to index
    %c0_15 = arith.constant 0 : index
    %15 = vector.load %arg8[%14, %c0_15] : memref<64x512xf32, #tpu.memory_space<vmem>>, vector<8x512xf32>
    %16 = arith.truncf %10 : vector<8x128xf32> to vector<8x128xbf16>
    %cst_16 = arith.constant dense<0.000000e+00> : vector<8x512xf32>
    %17 = tpu.matmul %16, %7, %cst_16 {dimension_numbers = #tpu.dot_dimension_numbers<[1], [0], [0], [1], [0, 0, 1, 1], [], []>} : vector<8x128xbf16>, vector<128x512xbf16>, vector<8x512xf32> -> vector<8x512xf32>
    %18 = arith.addf %15, %17 : vector<8x512xf32>
    %19 = arith.negf %18 : vector<8x512xf32>
    %20 = math.exp %19 : vector<8x512xf32>
    %cst_17 = arith.constant 1.000000e+00 : f32
    %21 = vector.broadcast %cst_17 : f32 to vector<8x512xf32>
    %22 = arith.addf %21, %20 : vector<8x512xf32>
    %23 = arith.divf %21, %22 : vector<8x512xf32>
    %24 = vector.extract_strided_slice %23 {offsets = [0, 0], sizes = [8, 128], strides = [1, 1]} : vector<8x512xf32> to vector<8x128xf32>
    %25 = vector.extract_strided_slice %23 {offsets = [0, 128], sizes = [8, 128], strides = [1, 1]} : vector<8x512xf32> to vector<8x128xf32>
    %26 = vector.extract_strided_slice %23 {offsets = [0, 256], sizes = [8, 128], strides = [1, 1]} : vector<8x512xf32> to vector<8x128xf32>
    %cst_18 = arith.constant 2.000000e+00 : f32
    %27 = vector.broadcast %cst_18 : f32 to vector<8x128xf32>
    %28 = arith.mulf %27, %26 : vector<8x128xf32>
    %cst_19 = arith.constant 1.000000e+00 : f32
    %29 = vector.broadcast %cst_19 : f32 to vector<8x128xf32>
    %30 = arith.subf %28, %29 : vector<8x128xf32>
    %31 = vector.extract_strided_slice %23 {offsets = [0, 384], sizes = [8, 128], strides = [1, 1]} : vector<8x512xf32> to vector<8x128xf32>
    %32 = arith.mulf %25, %11 : vector<8x128xf32>
    %33 = arith.mulf %24, %30 : vector<8x128xf32>
    %34 = arith.addf %32, %33 : vector<8x128xf32>
    %35 = math.tanh %34 : vector<8x128xf32>
    %36 = arith.mulf %31, %35 : vector<8x128xf32>
    %c1_i32 = arith.constant 1 : i32
    %c8_i32_20 = arith.constant 8 : i32
    %37 = arith.muli %c1_i32, %c8_i32_20 : i32
    %38 = tpu.assume_multiple %37, 8 : i32
    %39 = arith.index_cast %38 : i32 to index
    %c0_21 = arith.constant 0 : index
    %40 = vector.load %arg8[%39, %c0_21] : memref<64x512xf32, #tpu.memory_space<vmem>>, vector<8x512xf32>
    %41 = arith.truncf %36 : vector<8x128xf32> to vector<8x128xbf16>
    %cst_22 = arith.constant dense<0.000000e+00> : vector<8x512xf32>
    %42 = tpu.matmul %41, %7, %cst_22 {dimension_numbers = #tpu.dot_dimension_numbers<[1], [0], [0], [1], [0, 0, 1, 1], [], []>} : vector<8x128xbf16>, vector<128x512xbf16>, vector<8x512xf32> -> vector<8x512xf32>
    %43 = arith.addf %40, %42 : vector<8x512xf32>
    %44 = arith.negf %43 : vector<8x512xf32>
    %45 = math.exp %44 : vector<8x512xf32>
    %cst_23 = arith.constant 1.000000e+00 : f32
    %46 = vector.broadcast %cst_23 : f32 to vector<8x512xf32>
    %47 = arith.addf %46, %45 : vector<8x512xf32>
    %48 = arith.divf %46, %47 : vector<8x512xf32>
    %49 = vector.extract_strided_slice %48 {offsets = [0, 0], sizes = [8, 128], strides = [1, 1]} : vector<8x512xf32> to vector<8x128xf32>
    %50 = vector.extract_strided_slice %48 {offsets = [0, 128], sizes = [8, 128], strides = [1, 1]} : vector<8x512xf32> to vector<8x128xf32>
    %51 = vector.extract_strided_slice %48 {offsets = [0, 256], sizes = [8, 128], strides = [1, 1]} : vector<8x512xf32> to vector<8x128xf32>
    %cst_24 = arith.constant 2.000000e+00 : f32
    %52 = vector.broadcast %cst_24 : f32 to vector<8x128xf32>
    %53 = arith.mulf %52, %51 : vector<8x128xf32>
    %cst_25 = arith.constant 1.000000e+00 : f32
    %54 = vector.broadcast %cst_25 : f32 to vector<8x128xf32>
    %55 = arith.subf %53, %54 : vector<8x128xf32>
    %56 = vector.extract_strided_slice %48 {offsets = [0, 384], sizes = [8, 128], strides = [1, 1]} : vector<8x512xf32> to vector<8x128xf32>
    %57 = arith.mulf %50, %34 : vector<8x128xf32>
    %58 = arith.mulf %49, %55 : vector<8x128xf32>
    %59 = arith.addf %57, %58 : vector<8x128xf32>
    %60 = math.tanh %59 : vector<8x128xf32>
    %61 = arith.mulf %56, %60 : vector<8x128xf32>
    %c2_i32 = arith.constant 2 : i32
    %c8_i32_26 = arith.constant 8 : i32
    %62 = arith.muli %c2_i32, %c8_i32_26 : i32
    %63 = tpu.assume_multiple %62, 8 : i32
    %64 = arith.index_cast %63 : i32 to index
    %c0_27 = arith.constant 0 : index
    %65 = vector.load %arg8[%64, %c0_27] : memref<64x512xf32, #tpu.memory_space<vmem>>, vector<8x512xf32>
    %66 = arith.truncf %61 : vector<8x128xf32> to vector<8x128xbf16>
    %cst_28 = arith.constant dense<0.000000e+00> : vector<8x512xf32>
    %67 = tpu.matmul %66, %7, %cst_28 {dimension_numbers = #tpu.dot_dimension_numbers<[1], [0], [0], [1], [0, 0, 1, 1], [], []>} : vector<8x128xbf16>, vector<128x512xbf16>, vector<8x512xf32> -> vector<8x512xf32>
    %68 = arith.addf %65, %67 : vector<8x512xf32>
    %69 = arith.negf %68 : vector<8x512xf32>
    %70 = math.exp %69 : vector<8x512xf32>
    %cst_29 = arith.constant 1.000000e+00 : f32
    %71 = vector.broadcast %cst_29 : f32 to vector<8x512xf32>
    %72 = arith.addf %71, %70 : vector<8x512xf32>
    %73 = arith.divf %71, %72 : vector<8x512xf32>
    %74 = vector.extract_strided_slice %73 {offsets = [0, 0], sizes = [8, 128], strides = [1, 1]} : vector<8x512xf32> to vector<8x128xf32>
    %75 = vector.extract_strided_slice %73 {offsets = [0, 128], sizes = [8, 128], strides = [1, 1]} : vector<8x512xf32> to vector<8x128xf32>
    %76 = vector.extract_strided_slice %73 {offsets = [0, 256], sizes = [8, 128], strides = [1, 1]} : vector<8x512xf32> to vector<8x128xf32>
    %cst_30 = arith.constant 2.000000e+00 : f32
    %77 = vector.broadcast %cst_30 : f32 to vector<8x128xf32>
    %78 = arith.mulf %77, %76 : vector<8x128xf32>
    %cst_31 = arith.constant 1.000000e+00 : f32
    %79 = vector.broadcast %cst_31 : f32 to vector<8x128xf32>
    %80 = arith.subf %78, %79 : vector<8x128xf32>
    %81 = vector.extract_strided_slice %73 {offsets = [0, 384], sizes = [8, 128], strides = [1, 1]} : vector<8x512xf32> to vector<8x128xf32>
    %82 = arith.mulf %75, %59 : vector<8x128xf32>
    %83 = arith.mulf %74, %80 : vector<8x128xf32>
    %84 = arith.addf %82, %83 : vector<8x128xf32>
    %85 = math.tanh %84 : vector<8x128xf32>
    %86 = arith.mulf %81, %85 : vector<8x128xf32>
    %c3_i32 = arith.constant 3 : i32
    %c8_i32_32 = arith.constant 8 : i32
    %87 = arith.muli %c3_i32, %c8_i32_32 : i32
    %88 = tpu.assume_multiple %87, 8 : i32
    %89 = arith.index_cast %88 : i32 to index
    %c0_33 = arith.constant 0 : index
    %90 = vector.load %arg8[%89, %c0_33] : memref<64x512xf32, #tpu.memory_space<vmem>>, vector<8x512xf32>
    %91 = arith.truncf %86 : vector<8x128xf32> to vector<8x128xbf16>
    %cst_34 = arith.constant dense<0.000000e+00> : vector<8x512xf32>
    %92 = tpu.matmul %91, %7, %cst_34 {dimension_numbers = #tpu.dot_dimension_numbers<[1], [0], [0], [1], [0, 0, 1, 1], [], []>} : vector<8x128xbf16>, vector<128x512xbf16>, vector<8x512xf32> -> vector<8x512xf32>
    %93 = arith.addf %90, %92 : vector<8x512xf32>
    %94 = arith.negf %93 : vector<8x512xf32>
    %95 = math.exp %94 : vector<8x512xf32>
    %cst_35 = arith.constant 1.000000e+00 : f32
    %96 = vector.broadcast %cst_35 : f32 to vector<8x512xf32>
    %97 = arith.addf %96, %95 : vector<8x512xf32>
    %98 = arith.divf %96, %97 : vector<8x512xf32>
    %99 = vector.extract_strided_slice %98 {offsets = [0, 0], sizes = [8, 128], strides = [1, 1]} : vector<8x512xf32> to vector<8x128xf32>
    %100 = vector.extract_strided_slice %98 {offsets = [0, 128], sizes = [8, 128], strides = [1, 1]} : vector<8x512xf32> to vector<8x128xf32>
    %101 = vector.extract_strided_slice %98 {offsets = [0, 256], sizes = [8, 128], strides = [1, 1]} : vector<8x512xf32> to vector<8x128xf32>
    %cst_36 = arith.constant 2.000000e+00 : f32
    %102 = vector.broadcast %cst_36 : f32 to vector<8x128xf32>
    %103 = arith.mulf %102, %101 : vector<8x128xf32>
    %cst_37 = arith.constant 1.000000e+00 : f32
    %104 = vector.broadcast %cst_37 : f32 to vector<8x128xf32>
    %105 = arith.subf %103, %104 : vector<8x128xf32>
    %106 = vector.extract_strided_slice %98 {offsets = [0, 384], sizes = [8, 128], strides = [1, 1]} : vector<8x512xf32> to vector<8x128xf32>
    %107 = arith.mulf %100, %84 : vector<8x128xf32>
    %108 = arith.mulf %99, %105 : vector<8x128xf32>
    %109 = arith.addf %107, %108 : vector<8x128xf32>
    %110 = math.tanh %109 : vector<8x128xf32>
    %111 = arith.mulf %106, %110 : vector<8x128xf32>
    %c4_i32 = arith.constant 4 : i32
    %c8_i32_38 = arith.constant 8 : i32
    %112 = arith.muli %c4_i32, %c8_i32_38 : i32
    %113 = tpu.assume_multiple %112, 8 : i32
    %114 = arith.index_cast %113 : i32 to index
    %c0_39 = arith.constant 0 : index
    %115 = vector.load %arg8[%114, %c0_39] : memref<64x512xf32, #tpu.memory_space<vmem>>, vector<8x512xf32>
    %116 = arith.truncf %111 : vector<8x128xf32> to vector<8x128xbf16>
    %cst_40 = arith.constant dense<0.000000e+00> : vector<8x512xf32>
    %117 = tpu.matmul %116, %7, %cst_40 {dimension_numbers = #tpu.dot_dimension_numbers<[1], [0], [0], [1], [0, 0, 1, 1], [], []>} : vector<8x128xbf16>, vector<128x512xbf16>, vector<8x512xf32> -> vector<8x512xf32>
    %118 = arith.addf %115, %117 : vector<8x512xf32>
    %119 = arith.negf %118 : vector<8x512xf32>
    %120 = math.exp %119 : vector<8x512xf32>
    %cst_41 = arith.constant 1.000000e+00 : f32
    %121 = vector.broadcast %cst_41 : f32 to vector<8x512xf32>
    %122 = arith.addf %121, %120 : vector<8x512xf32>
    %123 = arith.divf %121, %122 : vector<8x512xf32>
    %124 = vector.extract_strided_slice %123 {offsets = [0, 0], sizes = [8, 128], strides = [1, 1]} : vector<8x512xf32> to vector<8x128xf32>
    %125 = vector.extract_strided_slice %123 {offsets = [0, 128], sizes = [8, 128], strides = [1, 1]} : vector<8x512xf32> to vector<8x128xf32>
    %126 = vector.extract_strided_slice %123 {offsets = [0, 256], sizes = [8, 128], strides = [1, 1]} : vector<8x512xf32> to vector<8x128xf32>
    %cst_42 = arith.constant 2.000000e+00 : f32
    %127 = vector.broadcast %cst_42 : f32 to vector<8x128xf32>
    %128 = arith.mulf %127, %126 : vector<8x128xf32>
    %cst_43 = arith.constant 1.000000e+00 : f32
    %129 = vector.broadcast %cst_43 : f32 to vector<8x128xf32>
    %130 = arith.subf %128, %129 : vector<8x128xf32>
    %131 = vector.extract_strided_slice %123 {offsets = [0, 384], sizes = [8, 128], strides = [1, 1]} : vector<8x512xf32> to vector<8x128xf32>
    %132 = arith.mulf %125, %109 : vector<8x128xf32>
    %133 = arith.mulf %124, %130 : vector<8x128xf32>
    %134 = arith.addf %132, %133 : vector<8x128xf32>
    %135 = math.tanh %134 : vector<8x128xf32>
    %136 = arith.mulf %131, %135 : vector<8x128xf32>
    %c5_i32 = arith.constant 5 : i32
    %c8_i32_44 = arith.constant 8 : i32
    %137 = arith.muli %c5_i32, %c8_i32_44 : i32
    %138 = tpu.assume_multiple %137, 8 : i32
    %139 = arith.index_cast %138 : i32 to index
    %c0_45 = arith.constant 0 : index
    %140 = vector.load %arg8[%139, %c0_45] : memref<64x512xf32, #tpu.memory_space<vmem>>, vector<8x512xf32>
    %141 = arith.truncf %136 : vector<8x128xf32> to vector<8x128xbf16>
    %cst_46 = arith.constant dense<0.000000e+00> : vector<8x512xf32>
    %142 = tpu.matmul %141, %7, %cst_46 {dimension_numbers = #tpu.dot_dimension_numbers<[1], [0], [0], [1], [0, 0, 1, 1], [], []>} : vector<8x128xbf16>, vector<128x512xbf16>, vector<8x512xf32> -> vector<8x512xf32>
    %143 = arith.addf %140, %142 : vector<8x512xf32>
    %144 = arith.negf %143 : vector<8x512xf32>
    %145 = math.exp %144 : vector<8x512xf32>
    %cst_47 = arith.constant 1.000000e+00 : f32
    %146 = vector.broadcast %cst_47 : f32 to vector<8x512xf32>
    %147 = arith.addf %146, %145 : vector<8x512xf32>
    %148 = arith.divf %146, %147 : vector<8x512xf32>
    %149 = vector.extract_strided_slice %148 {offsets = [0, 0], sizes = [8, 128], strides = [1, 1]} : vector<8x512xf32> to vector<8x128xf32>
    %150 = vector.extract_strided_slice %148 {offsets = [0, 128], sizes = [8, 128], strides = [1, 1]} : vector<8x512xf32> to vector<8x128xf32>
    %151 = vector.extract_strided_slice %148 {offsets = [0, 256], sizes = [8, 128], strides = [1, 1]} : vector<8x512xf32> to vector<8x128xf32>
    %cst_48 = arith.constant 2.000000e+00 : f32
    %152 = vector.broadcast %cst_48 : f32 to vector<8x128xf32>
    %153 = arith.mulf %152, %151 : vector<8x128xf32>
    %cst_49 = arith.constant 1.000000e+00 : f32
    %154 = vector.broadcast %cst_49 : f32 to vector<8x128xf32>
    %155 = arith.subf %153, %154 : vector<8x128xf32>
    %156 = vector.extract_strided_slice %148 {offsets = [0, 384], sizes = [8, 128], strides = [1, 1]} : vector<8x512xf32> to vector<8x128xf32>
    %157 = arith.mulf %150, %134 : vector<8x128xf32>
    %158 = arith.mulf %149, %155 : vector<8x128xf32>
    %159 = arith.addf %157, %158 : vector<8x128xf32>
    %160 = math.tanh %159 : vector<8x128xf32>
    %161 = arith.mulf %156, %160 : vector<8x128xf32>
    %c6_i32 = arith.constant 6 : i32
    %c8_i32_50 = arith.constant 8 : i32
    %162 = arith.muli %c6_i32, %c8_i32_50 : i32
    %163 = tpu.assume_multiple %162, 8 : i32
    %164 = arith.index_cast %163 : i32 to index
    %c0_51 = arith.constant 0 : index
    %165 = vector.load %arg8[%164, %c0_51] : memref<64x512xf32, #tpu.memory_space<vmem>>, vector<8x512xf32>
    %166 = arith.truncf %161 : vector<8x128xf32> to vector<8x128xbf16>
    %cst_52 = arith.constant dense<0.000000e+00> : vector<8x512xf32>
    %167 = tpu.matmul %166, %7, %cst_52 {dimension_numbers = #tpu.dot_dimension_numbers<[1], [0], [0], [1], [0, 0, 1, 1], [], []>} : vector<8x128xbf16>, vector<128x512xbf16>, vector<8x512xf32> -> vector<8x512xf32>
    %168 = arith.addf %165, %167 : vector<8x512xf32>
    %169 = arith.negf %168 : vector<8x512xf32>
    %170 = math.exp %169 : vector<8x512xf32>
    %cst_53 = arith.constant 1.000000e+00 : f32
    %171 = vector.broadcast %cst_53 : f32 to vector<8x512xf32>
    %172 = arith.addf %171, %170 : vector<8x512xf32>
    %173 = arith.divf %171, %172 : vector<8x512xf32>
    %174 = vector.extract_strided_slice %173 {offsets = [0, 0], sizes = [8, 128], strides = [1, 1]} : vector<8x512xf32> to vector<8x128xf32>
    %175 = vector.extract_strided_slice %173 {offsets = [0, 128], sizes = [8, 128], strides = [1, 1]} : vector<8x512xf32> to vector<8x128xf32>
    %176 = vector.extract_strided_slice %173 {offsets = [0, 256], sizes = [8, 128], strides = [1, 1]} : vector<8x512xf32> to vector<8x128xf32>
    %cst_54 = arith.constant 2.000000e+00 : f32
    %177 = vector.broadcast %cst_54 : f32 to vector<8x128xf32>
    %178 = arith.mulf %177, %176 : vector<8x128xf32>
    %cst_55 = arith.constant 1.000000e+00 : f32
    %179 = vector.broadcast %cst_55 : f32 to vector<8x128xf32>
    %180 = arith.subf %178, %179 : vector<8x128xf32>
    %181 = vector.extract_strided_slice %173 {offsets = [0, 384], sizes = [8, 128], strides = [1, 1]} : vector<8x512xf32> to vector<8x128xf32>
    %182 = arith.mulf %175, %159 : vector<8x128xf32>
    %183 = arith.mulf %174, %180 : vector<8x128xf32>
    %184 = arith.addf %182, %183 : vector<8x128xf32>
    %185 = math.tanh %184 : vector<8x128xf32>
    %186 = arith.mulf %181, %185 : vector<8x128xf32>
    %c7_i32 = arith.constant 7 : i32
    %c8_i32_56 = arith.constant 8 : i32
    %187 = arith.muli %c7_i32, %c8_i32_56 : i32
    %188 = tpu.assume_multiple %187, 8 : i32
    %189 = arith.index_cast %188 : i32 to index
    %c0_57 = arith.constant 0 : index
    %190 = vector.load %arg8[%189, %c0_57] : memref<64x512xf32, #tpu.memory_space<vmem>>, vector<8x512xf32>
    %191 = arith.truncf %186 : vector<8x128xf32> to vector<8x128xbf16>
    %cst_58 = arith.constant dense<0.000000e+00> : vector<8x512xf32>
    %192 = tpu.matmul %191, %7, %cst_58 {dimension_numbers = #tpu.dot_dimension_numbers<[1], [0], [0], [1], [0, 0, 1, 1], [], []>} : vector<8x128xbf16>, vector<128x512xbf16>, vector<8x512xf32> -> vector<8x512xf32>
    %193 = arith.addf %190, %192 : vector<8x512xf32>
    %194 = arith.negf %193 : vector<8x512xf32>
    %195 = math.exp %194 : vector<8x512xf32>
    %cst_59 = arith.constant 1.000000e+00 : f32
    %196 = vector.broadcast %cst_59 : f32 to vector<8x512xf32>
    %197 = arith.addf %196, %195 : vector<8x512xf32>
    %198 = arith.divf %196, %197 : vector<8x512xf32>
    %199 = vector.extract_strided_slice %198 {offsets = [0, 0], sizes = [8, 128], strides = [1, 1]} : vector<8x512xf32> to vector<8x128xf32>
    %200 = vector.extract_strided_slice %198 {offsets = [0, 128], sizes = [8, 128], strides = [1, 1]} : vector<8x512xf32> to vector<8x128xf32>
    %201 = vector.extract_strided_slice %198 {offsets = [0, 256], sizes = [8, 128], strides = [1, 1]} : vector<8x512xf32> to vector<8x128xf32>
    %cst_60 = arith.constant 2.000000e+00 : f32
    %202 = vector.broadcast %cst_60 : f32 to vector<8x128xf32>
    %203 = arith.mulf %202, %201 : vector<8x128xf32>
    %cst_61 = arith.constant 1.000000e+00 : f32
    %204 = vector.broadcast %cst_61 : f32 to vector<8x128xf32>
    %205 = arith.subf %203, %204 : vector<8x128xf32>
    %206 = vector.extract_strided_slice %198 {offsets = [0, 384], sizes = [8, 128], strides = [1, 1]} : vector<8x512xf32> to vector<8x128xf32>
    %207 = arith.mulf %200, %184 : vector<8x128xf32>
    %208 = arith.mulf %199, %205 : vector<8x128xf32>
    %209 = arith.addf %207, %208 : vector<8x128xf32>
    %210 = math.tanh %209 : vector<8x128xf32>
    %211 = arith.mulf %206, %210 : vector<8x128xf32>
    %c8_i32_62 = arith.constant 8 : i32
    %212 = vector.broadcast %8 : vector<1x128xf32> to vector<8x128xf32>
    %213 = arith.mulf %211, %212 : vector<8x128xf32>
    %cst_63 = arith.constant dense<0.000000e+00> : vector<8xf32>
    %214 = vector.multi_reduction <add>, %213, %cst_63 [1] : vector<8x128xf32> to vector<8xf32>
    %215 = vector.shape_cast %214 : vector<8xf32> to vector<8x1xf32>
    %216 = vector.broadcast %9 : vector<1x1xf32> to vector<8x1xf32>
    %217 = arith.addf %215, %216 : vector<8x1xf32>
    %c0_64 = arith.constant 0 : index
    %c0_65 = arith.constant 0 : index
    %218 = vector.load %arg7[%c0_64, %c0_65] : memref<8x1xf32, #tpu.memory_space<vmem>>, vector<8x1xf32>
    tpu.vector_store %arg7[%c0_64, %c0_65], %217 {strides = array<i32>} : memref<8x1xf32, #tpu.memory_space<vmem>>, vector<8x1xf32>,
    return
  }
  func.func @transform_0(%arg0: i32) -> (i32, i32) {
    %c0_i32 = arith.constant 0 : i32
    %c0_i32_0 = arith.constant 0 : i32
    %c0_i32_1 = arith.constant 0 : i32
    return %c0_i32, %c0_i32_0 : i32, i32
  }
  func.func @transform_1(%arg0: i32) -> (i32, i32) {
    %c0_i32 = arith.constant 0 : i32
    %c0_i32_0 = arith.constant 0 : i32
    %c0_i32_1 = arith.constant 0 : i32
    return %c0_i32, %c0_i32_0 : i32, i32
  }
  func.func @transform_2(%arg0: i32) -> (i32, i32) {
    %c0_i32 = arith.constant 0 : i32
    %c0_i32_0 = arith.constant 0 : i32
    %c0_i32_1 = arith.constant 0 : i32
    return %c0_i32, %c0_i32_0 : i32, i32
  }
  func.func @transform_3(%arg0: i32) -> (i32, i32) {
    %c0_i32 = arith.constant 0 : i32
    %c0_i32_0 = arith.constant 0 : i32
    %c0_i32_1 = arith.constant 0 : i32
    return %c0_i32, %c0_i32_0 : i32, i32
  }
  func.func @transform_4(%arg0: i32) -> (i32, i32) {
    %c0_i32 = arith.constant 0 : i32
    %c0_i32_0 = arith.constant 0 : i32
    %c0_i32_1 = arith.constant 0 : i32
    return %c0_i32, %c0_i32_0 : i32, i32
  }
  func.func @transform_5(%arg0: i32) -> (i32, i32) {
    %c0_i32 = arith.constant 0 : i32
    %c0_i32_0 = arith.constant 0 : i32
    %c0_i32_1 = arith.constant 0 : i32
    return %c0_i32, %c0_i32_0 : i32, i32
  }
  func.func @transform_6(%arg0: i32) -> (i32, i32) {
    %c0_i32 = arith.constant 0 : i32
    %c0_i32_0 = arith.constant 0 : i32
    %c0_i32_1 = arith.constant 0 : i32
    return %c0_i32, %c0_i32_0 : i32, i32
  }
}

</mosaic_0001>

<llo_original>
// kernel: ngram_eos_forward.1
$region0: #{ngram_eos_forward.1}
  #allocation0 [shape = 'u32[]', space=smem, size = 0x4, offset = 0x4, fixed_abs, tag = 'smem constant byte address 0x4 - core index']
  #allocation1 [shape = 'u32[144,128]{1,0:T(1,128)}', space=vmem, size = 0x12000, scoped, tag = 'internal scratch']
  #allocation2 [shape = 'f32[64,512]{1,0:T(8,128)}', space=vmem, size = 0x20000, scoped, tag = 'scratch operand']
  #allocation3 [shape = 'f32[1,1]{1,0:T(1,128)S(1)}', space=vmem, size = 0x200, scoped, tag = 'scoped memory for ngram_eos_forward.1']
  %s0 = inlined_call_operand.vmem [shape: bf16[64,32], index: 0, kind: input, shape index: {}]
  %s1 = inlined_call_operand.vmem [shape: bf16[32,512], index: 1, kind: input, shape index: {}]
  %s2 = inlined_call_operand.vmem [shape: bf16[128,512], index: 2, kind: input, shape index: {}]
  %s3 = inlined_call_operand.vmem [shape: f32[1,512], index: 3, kind: input, shape index: {}]
  %s4 = inlined_call_operand.vmem [shape: f32[1,128], index: 4, kind: input, shape index: {}]
  %s5 = inlined_call_operand.<no memory space> [shape: f32[1,1], index: 5, kind: input, shape index: {}]
  %s6 = inlined_call_operand.vmem [shape: f32[8,1], index: 6, kind: output, shape index: {}]
  %s7 = sld [smem:[#allocation0]]
  $region34: #{ngram_eos_forward.1} parent=0
    _
  %s9 = ssub.s32 1, %s7
  %s10 = scalar_select 0, %s9, %s7
  %v11 = vstv %s5
  %12 = vst [vmem:[#allocation3] sm:$0x1] %v11
  // Predicated region
  $region2: #{ngram_eos_forward.1} parent=0 // pred_check
    _
  $region3: #{ngram_eos_forward.1} parent=0 // pred_check_branch
    %14 = sbr.rel (0) target = $region5
  $region4: #{ngram_eos_forward.1} parent=0 // pred_region
    _
  $region5: #{ngram_eos_forward.1} parent=0 // pred_fallthru
    _
  // Predicated region
  $region6: #{ngram_eos_forward.1} parent=0 // pred_check
    _
  $region7: #{ngram_eos_forward.1} parent=0 // pred_check_branch
    %16 = sbr.rel (0) target = $region9
  $region8: #{ngram_eos_forward.1} parent=0 // pred_region
    _
  $region9: #{ngram_eos_forward.1} parent=0 // pred_fallthru
    _
  // Predicated region
  $region10: #{ngram_eos_forward.1} parent=0 // pred_check
    _
  $region11: #{ngram_eos_forward.1} parent=0 // pred_check_branch
    %18 = sbr.rel (0) target = $region13
  $region12: #{ngram_eos_forward.1} parent=0 // pred_region
    _
  $region13: #{ngram_eos_forward.1} parent=0 // pred_fallthru
    _
  // Predicated region
  $region14: #{ngram_eos_forward.1} parent=0 // pred_check
    _
  $region15: #{ngram_eos_forward.1} parent=0 // pred_check_branch
    %20 = sbr.rel (0) target = $region17
  $region16: #{ngram_eos_forward.1} parent=0 // pred_region
    _
  $region17: #{ngram_eos_forward.1} parent=0 // pred_fallthru
    _
  // Predicated region
  $region18: #{ngram_eos_forward.1} parent=0 // pred_check
    _
  $region19: #{ngram_eos_forward.1} parent=0 // pred_check_branch
    %22 = sbr.rel (0) target = $region21
  $region20: #{ngram_eos_forward.1} parent=0 // pred_region
    _
  $region21: #{ngram_eos_forward.1} parent=0 // pred_fallthru
    _
  // Predicated region
  $region22: #{ngram_eos_forward.1} parent=0 // pred_check
    _
  $region23: #{ngram_eos_forward.1} parent=0 // pred_check_branch
    %24 = sbr.rel (0) target = $region25
  $region24: #{ngram_eos_forward.1} parent=0 // pred_region
    _
  $region25: #{ngram_eos_forward.1} parent=0 // pred_fallthru
    _
  %v26 = vld [vmem:[%s0] sm:$0xf]
  %v27 = vld [vmem:[%s0 + $0x4] sm:$0xf]
  %v28 = vld [vmem:[%s0 + $0x8] sm:$0xf]
  %v29 = vld [vmem:[%s0 + $0xc] sm:$0xf]
  %v30 = vld [vmem:[%s0 + $0x10] sm:$0xf]
  %v31 = vld [vmem:[%s0 + $0x14] sm:$0xf]
  %v32 = vld [vmem:[%s0 + $0x18] sm:$0xf]
  %v33 = vld [vmem:[%s0 + $0x1c] sm:$0xf]
  %v34 = vld [vmem:[%s1] sm:$0xff]
  %v35 = vld [vmem:[%s1 + $0x8] sm:$0xff]
  %v36 = vld [vmem:[%s1 + $0x10] sm:$0xff]
  %v37 = vld [vmem:[%s1 + $0x18] sm:$0xff]
  %v38 = vld [vmem:[%s1 + $0x20] sm:$0xff]
  %v39 = vld [vmem:[%s1 + $0x28] sm:$0xff]
  %v40 = vld [vmem:[%s1 + $0x30] sm:$0xff]
  %v41 = vld [vmem:[%s1 + $0x38] sm:$0xff]
  %v42 = vld [vmem:[%s3] sm:$0xf]
  %v44 = vlaneseq
  %v45 = vshrl.u32 %v44, 7
  %v46 = vsub.s32 0, %v45
  %v47 = vrot.slane %v42, %v46
  %v48 = vlaneseq
  %v49 = vshrl.u32 %v48, 7
  %v50 = vsub.s32 1, %v49
  %v51 = vrot.slane %v42, %v50
  %v52 = vlaneseq
  %v53 = vshrl.u32 %v52, 7
  %v54 = vsub.s32 2, %v53
  %v55 = vrot.slane %v42, %v54
  %v56 = vlaneseq
  %v57 = vshrl.u32 %v56, 7
  %v58 = vsub.s32 3, %v57
  %v59 = vrot.slane %v42, %v58
  %v72 = vunpack.c.l.b16 %v26
  %v73 = vunpack.c.l.b16 %v27
  %v74 = vunpack.c.l.b16 %v28
  %v75 = vunpack.c.l.b16 %v29
  %v76 = vunpack.c.l.b16 %v30
  %v77 = vunpack.c.l.b16 %v31
  %v78 = vunpack.c.l.b16 %v32
  %v79 = vunpack.c.l.b16 %v33
  %v80 = vpack.c.b16 %v73, %v72
  %v81 = vpack.c.b16 %v75, %v74
  %v82 = vpack.c.b16 %v77, %v76
  %v83 = vpack.c.b16 %v79, %v78
  %v92 = vunpack.c.l.b16 %v34
  %v93 = vunpack.c.h.b16 %v34
  %v94 = vunpack.c.l.b16 %v35
  %v95 = vunpack.c.h.b16 %v35
  %v96 = vunpack.c.l.b16 %v36
  %v97 = vunpack.c.h.b16 %v36
  %v98 = vunpack.c.l.b16 %v37
  %v99 = vunpack.c.h.b16 %v37
  %v100 = vunpack.c.l.b16 %v38
  %v101 = vunpack.c.h.b16 %v38
  %v102 = vunpack.c.l.b16 %v39
  %v103 = vunpack.c.h.b16 %v39
  %v104 = vunpack.c.l.b16 %v40
  %v105 = vunpack.c.h.b16 %v40
  %v106 = vunpack.c.l.b16 %v41
  %v107 = vunpack.c.h.b16 %v41
  %v108 = vpack.c.b16 %v96, %v92
  %v109 = vpack.c.b16 %v97, %v93
  %v110 = vpack.c.b16 %v98, %v94
  %v111 = vpack.c.b16 %v99, %v95
  %v112 = vpack.c.b16 %v104, %v100
  %v113 = vpack.c.b16 %v105, %v101
  %v114 = vpack.c.b16 %v106, %v102
  %v115 = vpack.c.b16 %v107, %v103
  %vm124 = vcmask 261120
  %v126 = vsel %vm124, %v80, 0
  %v129 = vsel %vm124, %v81, 0
  %v132 = vsel %vm124, %v82, 0
  %v135 = vsel %vm124, %v83, 0
  %137 = vmatprep.subr.bf16.mxu0 0
  %138 = vmatpush1.bf16.msra.mxu0 0
  %139 = vmatprep.subr.bf16.mxu0 0
  %140 = vmatpush1.bf16.msra.mxu0 0
  %141 = vmatprep.subr.bf16.mxu0 0
  %142 = vmatpush1.bf16.msra.mxu0 0
  %143 = vmatprep.subr.bf16.mxu0 0
  %144 = vmatpush1.bf16.msra.mxu0 0
  %145 = vmatprep.subr.bf16.mxu0 0
  %146 = vmatpush1.bf16.msra.mxu0 0
  %147 = vmatprep.subr.bf16.mxu0 0
  %148 = vmatpush1.bf16.msra.mxu0 0
  %149 = vmatprep.subr.bf16.mxu0 %v113
  %150 = vmatpush1.bf16.msra.mxu0 %v112
  %151 = vmatprep.subr.bf16.mxu0 %v109
  %152 = vmatpush1.bf16.msra.mxu0 %v108
  %153 = vmatprep.subr.bf16.mxu0 0
  %154 = vmatpush2.bf16.msra.mxu0 0
  %155 = vmatprep.subr.bf16.mxu0 0
  %156 = vmatpush2.bf16.msra.mxu0 0
  %157 = vmatprep.subr.bf16.mxu0 0
  %158 = vmatpush2.bf16.msra.mxu0 0
  %159 = vmatprep.subr.bf16.mxu0 0
  %160 = vmatpush2.bf16.msra.mxu0 0
  %161 = vmatprep.subr.bf16.mxu0 0
  %162 = vmatpush2.bf16.msra.mxu0 0
  %163 = vmatprep.subr.bf16.mxu0 0
  %164 = vmatpush2.bf16.msra.mxu0 0
  %165 = vmatprep.subr.bf16.mxu0 0
  %166 = vmatpush2.bf16.msra.mxu0 0
  %167 = vmatprep.subr.bf16.mxu0 0
  %168 = vmatpush2.bf16.msra.mxu0 0
  %169 = vmatprep.mubr.bf16.mxu0 0
  %170 = vmatmul.mubr.bf16.gmra.mxu0 %v126
  %v171 = vpop.f32.mrf.mxu0
  %v172 = vadd.f32 %v47, %v171
  %v173 = vpop.f32.mrf.mxu0
  %v174 = vadd.f32 %v51, %v173
  %v175 = vpop.f32.mrf.mxu0
  %v176 = vadd.f32 %v47, %v175
  %v177 = vpop.f32.mrf.mxu0
  %v178 = vadd.f32 %v51, %v177
  %179 = vmatprep.mubr.bf16.mxu0 0
  %180 = vmatmul.mubr.bf16.gmra.mxu0 %v129
  %v181 = vpop.f32.mrf.mxu0
  %v182 = vadd.f32 %v47, %v181
  %v183 = vpop.f32.mrf.mxu0
  %v184 = vadd.f32 %v51, %v183
  %v185 = vpop.f32.mrf.mxu0
  %v186 = vadd.f32 %v47, %v185
  %v187 = vpop.f32.mrf.mxu0
  %v188 = vadd.f32 %v51, %v187
  %189 = vmatprep.mubr.bf16.mxu0 0
  %190 = vmatmul.mubr.bf16.gmra.mxu0 %v132
  %v191 = vpop.f32.mrf.mxu0
  %v192 = vadd.f32 %v47, %v191
  %v193 = vpop.f32.mrf.mxu0
  %v194 = vadd.f32 %v51, %v193
  %v195 = vpop.f32.mrf.mxu0
  %v196 = vadd.f32 %v47, %v195
  %v197 = vpop.f32.mrf.mxu0
  %v198 = vadd.f32 %v51, %v197
  %199 = vmatprep.mubr.bf16.mxu0 0
  %200 = vmatmul.mubr.bf16.gmra.mxu0 %v135
  %v201 = vpop.f32.mrf.mxu0
  %v202 = vadd.f32 %v47, %v201
  %v203 = vpop.f32.mrf.mxu0
  %v204 = vadd.f32 %v51, %v203
  %v205 = vpop.f32.mrf.mxu0
  %v206 = vadd.f32 %v47, %v205
  %v207 = vpop.f32.mrf.mxu0
  %v208 = vadd.f32 %v51, %v207
  %209 = vdwg.mxu0
  %210 = vmatprep.subr.bf16.mxu0 0
  %211 = vmatpush1.bf16.msra.mxu0 0
  %212 = vmatprep.subr.bf16.mxu0 0
  %213 = vmatpush1.bf16.msra.mxu0 0
  %214 = vmatprep.subr.bf16.mxu0 0
  %215 = vmatpush1.bf16.msra.mxu0 0
  %216 = vmatprep.subr.bf16.mxu0 0
  %217 = vmatpush1.bf16.msra.mxu0 0
  %218 = vmatprep.subr.bf16.mxu0 0
  %219 = vmatpush1.bf16.msra.mxu0 0
  %220 = vmatprep.subr.bf16.mxu0 0
  %221 = vmatpush1.bf16.msra.mxu0 0
  %222 = vmatprep.subr.bf16.mxu0 %v115
  %223 = vmatpush1.bf16.msra.mxu0 %v114
  %224 = vmatprep.subr.bf16.mxu0 %v111
  %225 = vmatpush1.bf16.msra.mxu0 %v110
  %226 = vmatprep.subr.bf16.mxu0 0
  %227 = vmatpush2.bf16.msra.mxu0 0
  %228 = vmatprep.subr.bf16.mxu0 0
  %229 = vmatpush2.bf16.msra.mxu0 0
  %230 = vmatprep.subr.bf16.mxu0 0
  %231 = vmatpush2.bf16.msra.mxu0 0
  %232 = vmatprep.subr.bf16.mxu0 0
  %233 = vmatpush2.bf16.msra.mxu0 0
  %234 = vmatprep.subr.bf16.mxu0 0
  %235 = vmatpush2.bf16.msra.mxu0 0
  %236 = vmatprep.subr.bf16.mxu0 0
  %237 = vmatpush2.bf16.msra.mxu0 0
  %238 = vmatprep.subr.bf16.mxu0 0
  %239 = vmatpush2.bf16.msra.mxu0 0
  %240 = vmatprep.subr.bf16.mxu0 0
  %241 = vmatpush2.bf16.msra.mxu0 0
  %242 = vmatprep.mubr.bf16.mxu0 0
  %243 = vmatmul.mubr.bf16.gmra.mxu0 %v126
  %v244 = vpop.f32.mrf.mxu0
  %v245 = vadd.f32 %v55, %v244
  %v246 = vpop.f32.mrf.mxu0
  %v247 = vadd.f32 %v59, %v246
  %v248 = vpop.f32.mrf.mxu0
  %v249 = vadd.f32 %v55, %v248
  %v250 = vpop.f32.mrf.mxu0
  %v251 = vadd.f32 %v59, %v250
  %252 = vmatprep.mubr.bf16.mxu0 0
  %253 = vmatmul.mubr.bf16.gmra.mxu0 %v129
  %v254 = vpop.f32.mrf.mxu0
  %v255 = vadd.f32 %v55, %v254
  %v256 = vpop.f32.mrf.mxu0
  %v257 = vadd.f32 %v59, %v256
  %v258 = vpop.f32.mrf.mxu0
  %v259 = vadd.f32 %v55, %v258
  %v260 = vpop.f32.mrf.mxu0
  %v261 = vadd.f32 %v59, %v260
  %262 = vmatprep.mubr.bf16.mxu0 0
  %263 = vmatmul.mubr.bf16.gmra.mxu0 %v132
  %v264 = vpop.f32.mrf.mxu0
  %v265 = vadd.f32 %v55, %v264
  %v266 = vpop.f32.mrf.mxu0
  %v267 = vadd.f32 %v59, %v266
  %v268 = vpop.f32.mrf.mxu0
  %v269 = vadd.f32 %v55, %v268
  %v270 = vpop.f32.mrf.mxu0
  %v271 = vadd.f32 %v59, %v270
  %272 = vmatprep.mubr.bf16.mxu0 0
  %273 = vmatmul.mubr.bf16.gmra.mxu0 %v135
  %v274 = vpop.f32.mrf.mxu0
  %v275 = vadd.f32 %v55, %v274
  %v276 = vpop.f32.mrf.mxu0
  %v277 = vadd.f32 %v59, %v276
  %v278 = vpop.f32.mrf.mxu0
  %v279 = vadd.f32 %v55, %v278
  %v280 = vpop.f32.mrf.mxu0
  %v281 = vadd.f32 %v59, %v280
  %282 = vdwg.mxu0
  %283 = vst [vmem:[#allocation2] sm:$0xff] %v172
  %284 = vst [vmem:[#allocation2 + $0x8] sm:$0xff] %v174
  %285 = vst [vmem:[#allocation2 + $0x10] sm:$0xff] %v245
  %286 = vst [vmem:[#allocation2 + $0x18] sm:$0xff] %v247
  %287 = vst [vmem:[#allocation2 + $0x20] sm:$0xff] %v176
  %288 = vst [vmem:[#allocation2 + $0x28] sm:$0xff] %v178
  %289 = vst [vmem:[#allocation2 + $0x30] sm:$0xff] %v249
  %290 = vst [vmem:[#allocation2 + $0x38] sm:$0xff] %v251
  %291 = vst [vmem:[#allocation2 + $0x40] sm:$0xff] %v182
  %292 = vst [vmem:[#allocation2 + $0x48] sm:$0xff] %v184
  %293 = vst [vmem:[#allocation2 + $0x50] sm:$0xff] %v255
  %294 = vst [vmem:[#allocation2 + $0x58] sm:$0xff] %v257
  %295 = vst [vmem:[#allocation2 + $0x60] sm:$0xff] %v186
  %296 = vst [vmem:[#allocation2 + $0x68] sm:$0xff] %v188
  %297 = vst [vmem:[#allocation2 + $0x70] sm:$0xff] %v259
  %298 = vst [vmem:[#allocation2 + $0x78] sm:$0xff] %v261
  %299 = vst [vmem:[#allocation2 + $0x80] sm:$0xff] %v192
  %300 = vst [vmem:[#allocation2 + $0x88] sm:$0xff] %v194
  %301 = vst [vmem:[#allocation2 + $0x90] sm:$0xff] %v265
  %302 = vst [vmem:[#allocation2 + $0x98] sm:$0xff] %v267
  %303 = vst [vmem:[#allocation2 + $0xa0] sm:$0xff] %v196
  %304 = vst [vmem:[#allocation2 + $0xa8] sm:$0xff] %v198
  %305 = vst [vmem:[#allocation2 + $0xb0] sm:$0xff] %v269
  %306 = vst [vmem:[#allocation2 + $0xb8] sm:$0xff] %v271
  %307 = vst [vmem:[#allocation2 + $0xc0] sm:$0xff] %v202
  %308 = vst [vmem:[#allocation2 + $0xc8] sm:$0xff] %v204
  %309 = vst [vmem:[#allocation2 + $0xd0] sm:$0xff] %v275
  %310 = vst [vmem:[#allocation2 + $0xd8] sm:$0xff] %v277
  %311 = vst [vmem:[#allocation2 + $0xe0] sm:$0xff] %v206
  %312 = vst [vmem:[#allocation2 + $0xe8] sm:$0xff] %v208
  %313 = vst [vmem:[#allocation2 + $0xf0] sm:$0xff] %v279
  %314 = vst [vmem:[#allocation2 + $0xf8] sm:$0xff] %v281
  %v315 = vld [vmem:[%s2] sm:$0xff]
  %v316 = vld [vmem:[%s2 + $0x8] sm:$0xff]
  %v317 = vld [vmem:[%s2 + $0x10] sm:$0xff]
  %v318 = vld [vmem:[%s2 + $0x18] sm:$0xff]
  %v319 = vld [vmem:[%s2 + $0x20] sm:$0xff]
  %v320 = vld [vmem:[%s2 + $0x28] sm:$0xff]
  %v321 = vld [vmem:[%s2 + $0x30] sm:$0xff]
  %v322 = vld [vmem:[%s2 + $0x38] sm:$0xff]
  %v323 = vld [vmem:[%s2 + $0x40] sm:$0xff]
  %v324 = vld [vmem:[%s2 + $0x48] sm:$0xff]
  %v325 = vld [vmem:[%s2 + $0x50] sm:$0xff]
  %v326 = vld [vmem:[%s2 + $0x58] sm:$0xff]
  %v327 = vld [vmem:[%s2 + $0x60] sm:$0xff]
  %v328 = vld [vmem:[%s2 + $0x68] sm:$0xff]
  %v329 = vld [vmem:[%s2 + $0x70] sm:$0xff]
  %v330 = vld [vmem:[%s2 + $0x78] sm:$0xff]
  %v331 = vld [vmem:[%s2 + $0x80] sm:$0xff]
  %v332 = vld [vmem:[%s2 + $0x88] sm:$0xff]
  %v333 = vld [vmem:[%s2 + $0x90] sm:$0xff]
  %v334 = vld [vmem:[%s2 + $0x98] sm:$0xff]
  %v335 = vld [vmem:[%s2 + $0xa0] sm:$0xff]
  %v336 = vld [vmem:[%s2 + $0xa8] sm:$0xff]
  %v337 = vld [vmem:[%s2 + $0xb0] sm:$0xff]
  %v338 = vld [vmem:[%s2 + $0xb8] sm:$0xff]
  %v339 = vld [vmem:[%s2 + $0xc0] sm:$0xff]
  %v340 = vld [vmem:[%s2 + $0xc8] sm:$0xff]
  %v341 = vld [vmem:[%s2 + $0xd0] sm:$0xff]
  %v342 = vld [vmem:[%s2 + $0xd8] sm:$0xff]
  %v343 = vld [vmem:[%s2 + $0xe0] sm:$0xff]
  %v344 = vld [vmem:[%s2 + $0xe8] sm:$0xff]
  %v345 = vld [vmem:[%s2 + $0xf0] sm:$0xff]
  %v346 = vld [vmem:[%s2 + $0xf8] sm:$0xff]
  %v347 = vld [vmem:[%s4] sm:$0x1]
  %v348 = vld [vmem:[#allocation3] sm:$0x1]
  %s349 = smul.u32 0, 4
  %s350 = smul.addr %s349, 8
  %s351 = scalar_lea.vmem [#allocation2], %s350
  %v352 = vld [vmem:[%s351] sm:$0xff]
  %v353 = vld [vmem:[%s351 + $0x8] sm:$0xff]
  %v354 = vld [vmem:[%s351 + $0x10] sm:$0xff]
  %v355 = vld [vmem:[%s351 + $0x18] sm:$0xff]
  %v388 = vunpack.c.l.b16 %v315
  %v389 = vunpack.c.h.b16 %v315
  %v390 = vunpack.c.l.b16 %v316
  %v391 = vunpack.c.h.b16 %v316
  %v392 = vunpack.c.l.b16 %v317
  %v393 = vunpack.c.h.b16 %v317
  %v394 = vunpack.c.l.b16 %v318
  %v395 = vunpack.c.h.b16 %v318
  %v396 = vunpack.c.l.b16 %v319
  %v397 = vunpack.c.h.b16 %v319
  %v398 = vunpack.c.l.b16 %v320
  %v399 = vunpack.c.h.b16 %v320
  %v400 = vunpack.c.l.b16 %v321
  %v401 = vunpack.c.h.b16 %v321
  %v402 = vunpack.c.l.b16 %v322
  %v403 = vunpack.c.h.b16 %v322
  %v404 = vunpack.c.l.b16 %v323
  %v405 = vunpack.c.h.b16 %v323
  %v406 = vunpack.c.l.b16 %v324
  %v407 = vunpack.c.h.b16 %v324
  %v408 = vunpack.c.l.b16 %v325
  %v409 = vunpack.c.h.b16 %v325
  %v410 = vunpack.c.l.b16 %v326
  %v411 = vunpack.c.h.b16 %v326
  %v412 = vunpack.c.l.b16 %v327
  %v413 = vunpack.c.h.b16 %v327
  %v414 = vunpack.c.l.b16 %v328
  %v415 = vunpack.c.h.b16 %v328
  %v416 = vunpack.c.l.b16 %v329
  %v417 = vunpack.c.h.b16 %v329
  %v418 = vunpack.c.l.b16 %v330
  %v419 = vunpack.c.h.b16 %v330
  %v420 = vunpack.c.l.b16 %v331
  %v421 = vunpack.c.h.b16 %v331
  %v422 = vunpack.c.l.b16 %v332
  %v423 = vunpack.c.h.b16 %v332
  %v424 = vunpack.c.l.b16 %v333
  %v425 = vunpack.c.h.b16 %v333
  %v426 = vunpack.c.l.b16 %v334
  %v427 = vunpack.c.h.b16 %v334
  %v428 = vunpack.c.l.b16 %v335
  %v429 = vunpack.c.h.b16 %v335
  %v430 = vunpack.c.l.b16 %v336
  %v431 = vunpack.c.h.b16 %v336
  %v432 = vunpack.c.l.b16 %v337
  %v433 = vunpack.c.h.b16 %v337
  %v434 = vunpack.c.l.b16 %v338
  %v435 = vunpack.c.h.b16 %v338
  %v436 = vunpack.c.l.b16 %v339
  %v437 = vunpack.c.h.b16 %v339
  %v438 = vunpack.c.l.b16 %v340
  %v439 = vunpack.c.h.b16 %v340
  %v440 = vunpack.c.l.b16 %v341
  %v441 = vunpack.c.h.b16 %v341
  %v442 = vunpack.c.l.b16 %v342
  %v443 = vunpack.c.h.b16 %v342
  %v444 = vunpack.c.l.b16 %v343
  %v445 = vunpack.c.h.b16 %v343
  %v446 = vunpack.c.l.b16 %v344
  %v447 = vunpack.c.h.b16 %v344
  %v448 = vunpack.c.l.b16 %v345
  %v449 = vunpack.c.h.b16 %v345
  %v450 = vunpack.c.l.b16 %v346
  %v451 = vunpack.c.h.b16 %v346
  %v452 = vpack.c.b16 %v392, %v388
  %v453 = vpack.c.b16 %v393, %v389
  %v454 = vpack.c.b16 %v394, %v390
  %v455 = vpack.c.b16 %v395, %v391
  %v456 = vpack.c.b16 %v400, %v396
  %v457 = vpack.c.b16 %v401, %v397
  %v458 = vpack.c.b16 %v402, %v398
  %v459 = vpack.c.b16 %v403, %v399
  %v460 = vpack.c.b16 %v408, %v404
  %v461 = vpack.c.b16 %v409, %v405
  %v462 = vpack.c.b16 %v410, %v406
  %v463 = vpack.c.b16 %v411, %v407
  %v464 = vpack.c.b16 %v416, %v412
  %v465 = vpack.c.b16 %v417, %v413
  %v466 = vpack.c.b16 %v418, %v414
  %v467 = vpack.c.b16 %v419, %v415
  %v468 = vpack.c.b16 %v424, %v420
  %v469 = vpack.c.b16 %v425, %v421
  %v470 = vpack.c.b16 %v426, %v422
  %v471 = vpack.c.b16 %v427, %v423
  %v472 = vpack.c.b16 %v432, %v428
  %v473 = vpack.c.b16 %v433, %v429
  %v474 = vpack.c.b16 %v434, %v430
  %v475 = vpack.c.b16 %v435, %v431
  %v476 = vpack.c.b16 %v440, %v436
  %v477 = vpack.c.b16 %v441, %v437
  %v478 = vpack.c.b16 %v442, %v438
  %v479 = vpack.c.b16 %v443, %v439
  %v480 = vpack.c.b16 %v448, %v444
  %v481 = vpack.c.b16 %v449, %v445
  %v482 = vpack.c.b16 %v450, %v446
  %v483 = vpack.c.b16 %v451, %v447
  %516 = vmatprep.subr.bf16.mxu0 %v481
  %517 = vmatpush1.bf16.msra.mxu0 %v480
  %518 = vmatprep.subr.bf16.mxu0 %v477
  %519 = vmatpush1.bf16.msra.mxu0 %v476
  %520 = vmatprep.subr.bf16.mxu0 %v473
  %521 = vmatpush1.bf16.msra.mxu0 %v472
  %522 = vmatprep.subr.bf16.mxu0 %v469
  %523 = vmatpush1.bf16.msra.mxu0 %v468
  %524 = vmatprep.subr.bf16.mxu0 %v465
  %525 = vmatpush1.bf16.msra.mxu0 %v464
  %526 = vmatprep.subr.bf16.mxu0 %v461
  %527 = vmatpush1.bf16.msra.mxu0 %v460
  %528 = vmatprep.subr.bf16.mxu0 %v457
  %529 = vmatpush1.bf16.msra.mxu0 %v456
  %530 = vmatprep.subr.bf16.mxu0 %v453
  %531 = vmatpush1.bf16.msra.mxu0 %v452
  %532 = vmatprep.subr.bf16.mxu0 0
  %533 = vmatpush2.bf16.msra.mxu0 0
  %534 = vmatprep.subr.bf16.mxu0 0
  %535 = vmatpush2.bf16.msra.mxu0 0
  %536 = vmatprep.subr.bf16.mxu0 0
  %537 = vmatpush2.bf16.msra.mxu0 0
  %538 = vmatprep.subr.bf16.mxu0 0
  %539 = vmatpush2.bf16.msra.mxu0 0
  %540 = vmatprep.subr.bf16.mxu0 0
  %541 = vmatpush2.bf16.msra.mxu0 0
  %542 = vmatprep.subr.bf16.mxu0 0
  %543 = vmatpush2.bf16.msra.mxu0 0
  %544 = vmatprep.subr.bf16.mxu0 0
  %545 = vmatpush2.bf16.msra.mxu0 0
  %546 = vmatprep.subr.bf16.mxu0 0
  %547 = vmatpush2.bf16.msra.mxu0 0
  %548 = vmatprep.mubr.bf16.mxu0 0
  %549 = vmatmul.mubr.bf16.gmra.mxu0 0
  %v550 = vpop.f32.mrf.mxu0
  %v551 = vadd.f32 0.0, %v550
  %v552 = vpop.f32.mrf.mxu0
  %v553 = vadd.f32 0.0, %v552
  %v554 = vpop.f32.mrf.mxu0
  %v555 = vpop.f32.mrf.mxu0
  %556 = vdwg.mxu0
  %557 = vmatprep.subr.bf16.mxu0 %v483
  %558 = vmatpush1.bf16.msra.mxu0 %v482
  %559 = vmatprep.subr.bf16.mxu0 %v479
  %560 = vmatpush1.bf16.msra.mxu0 %v478
  %561 = vmatprep.subr.bf16.mxu0 %v475
  %562 = vmatpush1.bf16.msra.mxu0 %v474
  %563 = vmatprep.subr.bf16.mxu0 %v471
  %564 = vmatpush1.bf16.msra.mxu0 %v470
  %565 = vmatprep.subr.bf16.mxu0 %v467
  %566 = vmatpush1.bf16.msra.mxu0 %v466
  %567 = vmatprep.subr.bf16.mxu0 %v463
  %568 = vmatpush1.bf16.msra.mxu0 %v462
  %569 = vmatprep.subr.bf16.mxu0 %v459
  %570 = vmatpush1.bf16.msra.mxu0 %v458
  %571 = vmatprep.subr.bf16.mxu0 %v455
  %572 = vmatpush1.bf16.msra.mxu0 %v454
  %573 = vmatprep.subr.bf16.mxu0 0
  %574 = vmatpush2.bf16.msra.mxu0 0
  %575 = vmatprep.subr.bf16.mxu0 0
  %576 = vmatpush2.bf16.msra.mxu0 0
  %577 = vmatprep.subr.bf16.mxu0 0
  %578 = vmatpush2.bf16.msra.mxu0 0
  %579 = vmatprep.subr.bf16.mxu0 0
  %580 = vmatpush2.bf16.msra.mxu0 0
  %581 = vmatprep.subr.bf16.mxu0 0
  %582 = vmatpush2.bf16.msra.mxu0 0
  %583 = vmatprep.subr.bf16.mxu0 0
  %584 = vmatpush2.bf16.msra.mxu0 0
  %585 = vmatprep.subr.bf16.mxu0 0
  %586 = vmatpush2.bf16.msra.mxu0 0
  %587 = vmatprep.subr.bf16.mxu0 0
  %588 = vmatpush2.bf16.msra.mxu0 0
  %589 = vmatprep.mubr.bf16.mxu0 0
  %590 = vmatmul.mubr.bf16.gmra.mxu0 0
  %v591 = vpop.f32.mrf.mxu0
  %v592 = vadd.f32 0.0, %v591
  %v593 = vpop.f32.mrf.mxu0
  %v594 = vadd.f32 0.0, %v593
  %v595 = vpop.f32.mrf.mxu0
  %v596 = vpop.f32.mrf.mxu0
  %597 = vdwg.mxu0
  %v598 = vadd.f32 %v352, %v551
  %v599 = vadd.f32 %v353, %v553
  %v600 = vadd.f32 %v354, %v592
  %v601 = vadd.f32 %v355, %v594
  %v602 = vxor.u32 %v598, 2147483648
  %v603 = vxor.u32 %v599, 2147483648
  %v604 = vxor.u32 %v600, 2147483648
  %v605 = vxor.u32 %v601, 2147483648
  %v606 = vmul.f32 %v602, 1.442695
  %v607 = vpow.pop %v606
  %v608 = vmul.f32 %v603, 1.442695
  %v609 = vpow.pop %v608
  %v610 = vmul.f32 %v604, 1.442695
  %v611 = vpow.pop %v610
  %v612 = vmul.f32 %v605, 1.442695
  %v613 = vpow.pop %v612
  %v614 = vadd.f32 %v607, 1.0
  %v615 = vadd.f32 %v609, 1.0
  %v616 = vadd.f32 %v611, 1.0
  %v617 = vadd.f32 %v613, 1.0
  %v618 = vrcp.pop %v614
  %v619 = vmul.f32 1.0, %v618
  %v620 = vrcp.pop %v615
  %v621 = vmul.f32 1.0, %v620
  %v622 = vrcp.pop %v616
  %v623 = vmul.f32 1.0, %v622
  %v624 = vrcp.pop %v617
  %v625 = vmul.f32 1.0, %v624
  %v626 = vmul.f32 %v623, 2.0
  %v627 = vsub.f32 %v626, 1.0
  %v628 = vmul.f32 %v621, 0.0
  %v629 = vmul.f32 %v619, %v627
  %v630 = vadd.f32 %v628, %v629
  %v631 = vtanh.pop %v630
  %v632 = vmul.f32 %v625, %v631
  %s633 = smul.u32 1, 4
  %s634 = smul.addr %s633, 8
  %s635 = scalar_lea.vmem [#allocation2], %s634
  %v636 = vld [vmem:[%s635] sm:$0xff]
  %v637 = vld [vmem:[%s635 + $0x8] sm:$0xff]
  %v638 = vld [vmem:[%s635 + $0x10] sm:$0xff]
  %v639 = vld [vmem:[%s635 + $0x18] sm:$0xff]
  %v640 = vpack.c.bf16 %v632, %v632
  %641 = vmatprep.subr.bf16.mxu0 %v481
  %642 = vmatpush1.bf16.msra.mxu0 %v480
  %643 = vmatprep.subr.bf16.mxu0 %v477
  %644 = vmatpush1.bf16.msra.mxu0 %v476
  %645 = vmatprep.subr.bf16.mxu0 %v473
  %646 = vmatpush1.bf16.msra.mxu0 %v472
  %647 = vmatprep.subr.bf16.mxu0 %v469
  %648 = vmatpush1.bf16.msra.mxu0 %v468
  %649 = vmatprep.subr.bf16.mxu0 %v465
  %650 = vmatpush1.bf16.msra.mxu0 %v464
  %651 = vmatprep.subr.bf16.mxu0 %v461
  %652 = vmatpush1.bf16.msra.mxu0 %v460
  %653 = vmatprep.subr.bf16.mxu0 %v457
  %654 = vmatpush1.bf16.msra.mxu0 %v456
  %655 = vmatprep.subr.bf16.mxu0 %v453
  %656 = vmatpush1.bf16.msra.mxu0 %v452
  %657 = vmatprep.subr.bf16.mxu0 0
  %658 = vmatpush2.bf16.msra.mxu0 0
  %659 = vmatprep.subr.bf16.mxu0 0
  %660 = vmatpush2.bf16.msra.mxu0 0
  %661 = vmatprep.subr.bf16.mxu0 0
  %662 = vmatpush2.bf16.msra.mxu0 0
  %663 = vmatprep.subr.bf16.mxu0 0
  %664 = vmatpush2.bf16.msra.mxu0 0
  %665 = vmatprep.subr.bf16.mxu0 0
  %666 = vmatpush2.bf16.msra.mxu0 0
  %667 = vmatprep.subr.bf16.mxu0 0
  %668 = vmatpush2.bf16.msra.mxu0 0
  %669 = vmatprep.subr.bf16.mxu0 0
  %670 = vmatpush2.bf16.msra.mxu0 0
  %671 = vmatprep.subr.bf16.mxu0 0
  %672 = vmatpush2.bf16.msra.mxu0 0
  %673 = vmatprep.mubr.bf16.mxu0 0
  %674 = vmatmul.mubr.bf16.gmra.mxu0 %v640
  %v675 = vpop.f32.mrf.mxu0
  %v676 = vadd.f32 0.0, %v675
  %v677 = vpop.f32.mrf.mxu0
  %v678 = vadd.f32 0.0, %v677
  %v679 = vpop.f32.mrf.mxu0
  %v680 = vpop.f32.mrf.mxu0
  %681 = vdwg.mxu0
  %682 = vmatprep.subr.bf16.mxu0 %v483
  %683 = vmatpush1.bf16.msra.mxu0 %v482
  %684 = vmatprep.subr.bf16.mxu0 %v479
  %685 = vmatpush1.bf16.msra.mxu0 %v478
  %686 = vmatprep.subr.bf16.mxu0 %v475
  %687 = vmatpush1.bf16.msra.mxu0 %v474
  %688 = vmatprep.subr.bf16.mxu0 %v471
  %689 = vmatpush1.bf16.msra.mxu0 %v470
  %690 = vmatprep.subr.bf16.mxu0 %v467
  %691 = vmatpush1.bf16.msra.mxu0 %v466
  %692 = vmatprep.subr.bf16.mxu0 %v463
  %693 = vmatpush1.bf16.msra.mxu0 %v462
  %694 = vmatprep.subr.bf16.mxu0 %v459
  %695 = vmatpush1.bf16.msra.mxu0 %v458
  %696 = vmatprep.subr.bf16.mxu0 %v455
  %697 = vmatpush1.bf16.msra.mxu0 %v454
  %698 = vmatprep.subr.bf16.mxu0 0
  %699 = vmatpush2.bf16.msra.mxu0 0
  %700 = vmatprep.subr.bf16.mxu0 0
  %701 = vmatpush2.bf16.msra.mxu0 0
  %702 = vmatprep.subr.bf16.mxu0 0
  %703 = vmatpush2.bf16.msra.mxu0 0
  %704 = vmatprep.subr.bf16.mxu0 0
  %705 = vmatpush2.bf16.msra.mxu0 0
  %706 = vmatprep.subr.bf16.mxu0 0
  %707 = vmatpush2.bf16.msra.mxu0 0
  %708 = vmatprep.subr.bf16.mxu0 0
  %709 = vmatpush2.bf16.msra.mxu0 0
  %710 = vmatprep.subr.bf16.mxu0 0
  %711 = vmatpush2.bf16.msra.mxu0 0
  %712 = vmatprep.subr.bf16.mxu0 0
  %713 = vmatpush2.bf16.msra.mxu0 0
  %714 = vmatprep.mubr.bf16.mxu0 0
  %715 = vmatmul.mubr.bf16.gmra.mxu0 %v640
  %v716 = vpop.f32.mrf.mxu0
  %v717 = vadd.f32 0.0, %v716
  %v718 = vpop.f32.mrf.mxu0
  %v719 = vadd.f32 0.0, %v718
  %v720 = vpop.f32.mrf.mxu0
  %v721 = vpop.f32.mrf.mxu0
  %722 = vdwg.mxu0
  %v723 = vadd.f32 %v636, %v676
  %v724 = vadd.f32 %v637, %v678
  %v725 = vadd.f32 %v638, %v717
  %v726 = vadd.f32 %v639, %v719
  %v727 = vxor.u32 %v723, 2147483648
  %v728 = vxor.u32 %v724, 2147483648
  %v729 = vxor.u32 %v725, 2147483648
  %v730 = vxor.u32 %v726, 2147483648
  %v731 = vmul.f32 %v727, 1.442695
  %v732 = vpow.pop %v731
  %v733 = vmul.f32 %v728, 1.442695
  %v734 = vpow.pop %v733
  %v735 = vmul.f32 %v729, 1.442695
  %v736 = vpow.pop %v735
  %v737 = vmul.f32 %v730, 1.442695
  %v738 = vpow.pop %v737
  %v739 = vadd.f32 %v732, 1.0
  %v740 = vadd.f32 %v734, 1.0
  %v741 = vadd.f32 %v736, 1.0
  %v742 = vadd.f32 %v738, 1.0
  %v743 = vrcp.pop %v739
  %v744 = vmul.f32 1.0, %v743
  %v745 = vrcp.pop %v740
  %v746 = vmul.f32 1.0, %v745
  %v747 = vrcp.pop %v741
  %v748 = vmul.f32 1.0, %v747
  %v749 = vrcp.pop %v742
  %v750 = vmul.f32 1.0, %v749
  %v751 = vmul.f32 %v748, 2.0
  %v752 = vsub.f32 %v751, 1.0
  %v753 = vmul.f32 %v746, %v630
  %v754 = vmul.f32 %v744, %v752
  %v755 = vadd.f32 %v753, %v754
  %v756 = vtanh.pop %v755
  %v757 = vmul.f32 %v750, %v756
  %s758 = smul.u32 2, 4
  %s759 = smul.addr %s758, 8
  %s760 = scalar_lea.vmem [#allocation2], %s759
  %v761 = vld [vmem:[%s760] sm:$0xff]
  %v762 = vld [vmem:[%s760 + $0x8] sm:$0xff]
  %v763 = vld [vmem:[%s760 + $0x10] sm:$0xff]
  %v764 = vld [vmem:[%s760 + $0x18] sm:$0xff]
  %v765 = vpack.c.bf16 %v757, %v757
  %766 = vmatprep.subr.bf16.mxu0 %v481
  %767 = vmatpush1.bf16.msra.mxu0 %v480
  %768 = vmatprep.subr.bf16.mxu0 %v477
  %769 = vmatpush1.bf16.msra.mxu0 %v476
  %770 = vmatprep.subr.bf16.mxu0 %v473
  %771 = vmatpush1.bf16.msra.mxu0 %v472
  %772 = vmatprep.subr.bf16.mxu0 %v469
  %773 = vmatpush1.bf16.msra.mxu0 %v468
  %774 = vmatprep.subr.bf16.mxu0 %v465
  %775 = vmatpush1.bf16.msra.mxu0 %v464
  %776 = vmatprep.subr.bf16.mxu0 %v461
  %777 = vmatpush1.bf16.msra.mxu0 %v460
  %778 = vmatprep.subr.bf16.mxu0 %v457
  %779 = vmatpush1.bf16.msra.mxu0 %v456
  %780 = vmatprep.subr.bf16.mxu0 %v453
  %781 = vmatpush1.bf16.msra.mxu0 %v452
  %782 = vmatprep.subr.bf16.mxu0 0
  %783 = vmatpush2.bf16.msra.mxu0 0
  %784 = vmatprep.subr.bf16.mxu0 0
  %785 = vmatpush2.bf16.msra.mxu0 0
  %786 = vmatprep.subr.bf16.mxu0 0
  %787 = vmatpush2.bf16.msra.mxu0 0
  %788 = vmatprep.subr.bf16.mxu0 0
  %789 = vmatpush2.bf16.msra.mxu0 0
  %790 = vmatprep.subr.bf16.mxu0 0
  %791 = vmatpush2.bf16.msra.mxu0 0
  %792 = vmatprep.subr.bf16.mxu0 0
  %793 = vmatpush2.bf16.msra.mxu0 0
  %794 = vmatprep.subr.bf16.mxu0 0
  %795 = vmatpush2.bf16.msra.mxu0 0
  %796 = vmatprep.subr.bf16.mxu0 0
  %797 = vmatpush2.bf16.msra.mxu0 0
  %798 = vmatprep.mubr.bf16.mxu0 0
  %799 = vmatmul.mubr.bf16.gmra.mxu0 %v765
  %v800 = vpop.f32.mrf.mxu0
  %v801 = vadd.f32 0.0, %v800
  %v802 = vpop.f32.mrf.mxu0
  %v803 = vadd.f32 0.0, %v802
  %v804 = vpop.f32.mrf.mxu0
  %v805 = vpop.f32.mrf.mxu0
  %806 = vdwg.mxu0
  %807 = vmatprep.subr.bf16.mxu0 %v483
  %808 = vmatpush1.bf16.msra.mxu0 %v482
  %809 = vmatprep.subr.bf16.mxu0 %v479
  %810 = vmatpush1.bf16.msra.mxu0 %v478
  %811 = vmatprep.subr.bf16.mxu0 %v475
  %812 = vmatpush1.bf16.msra.mxu0 %v474
  %813 = vmatprep.subr.bf16.mxu0 %v471
  %814 = vmatpush1.bf16.msra.mxu0 %v470
  %815 = vmatprep.subr.bf16.mxu0 %v467
  %816 = vmatpush1.bf16.msra.mxu0 %v466
  %817 = vmatprep.subr.bf16.mxu0 %v463
  %818 = vmatpush1.bf16.msra.mxu0 %v462
  %819 = vmatprep.subr.bf16.mxu0 %v459
  %820 = vmatpush1.bf16.msra.mxu0 %v458
  %821 = vmatprep.subr.bf16.mxu0 %v455
  %822 = vmatpush1.bf16.msra.mxu0 %v454
  %823 = vmatprep.subr.bf16.mxu0 0
  %824 = vmatpush2.bf16.msra.mxu0 0
  %825 = vmatprep.subr.bf16.mxu0 0
  %826 = vmatpush2.bf16.msra.mxu0 0
  %827 = vmatprep.subr.bf16.mxu0 0
  %828 = vmatpush2.bf16.msra.mxu0 0
  %829 = vmatprep.subr.bf16.mxu0 0
  %830 = vmatpush2.bf16.msra.mxu0 0
  %831 = vmatprep.subr.bf16.mxu0 0
  %832 = vmatpush2.bf16.msra.mxu0 0
  %833 = vmatprep.subr.bf16.mxu0 0
  %834 = vmatpush2.bf16.msra.mxu0 0
  %835 = vmatprep.subr.bf16.mxu0 0
  %836 = vmatpush2.bf16.msra.mxu0 0
  %837 = vmatprep.subr.bf16.mxu0 0
  %838 = vmatpush2.bf16.msra.mxu0 0
  %839 = vmatprep.mubr.bf16.mxu0 0
  %840 = vmatmul.mubr.bf16.gmra.mxu0 %v765
  %v841 = vpop.f32.mrf.mxu0
  %v842 = vadd.f32 0.0, %v841
  %v843 = vpop.f32.mrf.mxu0
  %v844 = vadd.f32 0.0, %v843
  %v845 = vpop.f32.mrf.mxu0
  %v846 = vpop.f32.mrf.mxu0
  %847 = vdwg.mxu0
  %v848 = vadd.f32 %v761, %v801
  %v849 = vadd.f32 %v762, %v803
  %v850 = vadd.f32 %v763, %v842
  %v851 = vadd.f32 %v764, %v844
  %v852 = vxor.u32 %v848, 2147483648
  %v853 = vxor.u32 %v849, 2147483648
  %v854 = vxor.u32 %v850, 2147483648
  %v855 = vxor.u32 %v851, 2147483648
  %v856 = vmul.f32 %v852, 1.442695
  %v857 = vpow.pop %v856
  %v858 = vmul.f32 %v853, 1.442695
  %v859 = vpow.pop %v858
  %v860 = vmul.f32 %v854, 1.442695
  %v861 = vpow.pop %v860
  %v862 = vmul.f32 %v855, 1.442695
  %v863 = vpow.pop %v862
  %v864 = vadd.f32 %v857, 1.0
  %v865 = vadd.f32 %v859, 1.0
  %v866 = vadd.f32 %v861, 1.0
  %v867 = vadd.f32 %v863, 1.0
  %v868 = vrcp.pop %v864
  %v869 = vmul.f32 1.0, %v868
  %v870 = vrcp.pop %v865
  %v871 = vmul.f32 1.0, %v870
  %v872 = vrcp.pop %v866
  %v873 = vmul.f32 1.0, %v872
  %v874 = vrcp.pop %v867
  %v875 = vmul.f32 1.0, %v874
  %v876 = vmul.f32 %v873, 2.0
  %v877 = vsub.f32 %v876, 1.0
  %v878 = vmul.f32 %v871, %v755
  %v879 = vmul.f32 %v869, %v877
  %v880 = vadd.f32 %v878, %v879
  %v881 = vtanh.pop %v880
  %v882 = vmul.f32 %v875, %v881
  %s883 = smul.u32 3, 4
  %s884 = smul.addr %s883, 8
  %s885 = scalar_lea.vmem [#allocation2], %s884
  %v886 = vld [vmem:[%s885] sm:$0xff]
  %v887 = vld [vmem:[%s885 + $0x8] sm:$0xff]
  %v888 = vld [vmem:[%s885 + $0x10] sm:$0xff]
  %v889 = vld [vmem:[%s885 + $0x18] sm:$0xff]
  %v890 = vpack.c.bf16 %v882, %v882
  %891 = vmatprep.subr.bf16.mxu0 %v481
  %892 = vmatpush1.bf16.msra.mxu0 %v480
  %893 = vmatprep.subr.bf16.mxu0 %v477
  %894 = vmatpush1.bf16.msra.mxu0 %v476
  %895 = vmatprep.subr.bf16.mxu0 %v473
  %896 = vmatpush1.bf16.msra.mxu0 %v472
  %897 = vmatprep.subr.bf16.mxu0 %v469
  %898 = vmatpush1.bf16.msra.mxu0 %v468
  %899 = vmatprep.subr.bf16.mxu0 %v465
  %900 = vmatpush1.bf16.msra.mxu0 %v464
  %901 = vmatprep.subr.bf16.mxu0 %v461
  %902 = vmatpush1.bf16.msra.mxu0 %v460
  %903 = vmatprep.subr.bf16.mxu0 %v457
  %904 = vmatpush1.bf16.msra.mxu0 %v456
  %905 = vmatprep.subr.bf16.mxu0 %v453
  %906 = vmatpush1.bf16.msra.mxu0 %v452
  %907 = vmatprep.subr.bf16.mxu0 0
  %908 = vmatpush2.bf16.msra.mxu0 0
  %909 = vmatprep.subr.bf16.mxu0 0
  %910 = vmatpush2.bf16.msra.mxu0 0
  %911 = vmatprep.subr.bf16.mxu0 0
  %912 = vmatpush2.bf16.msra.mxu0 0
  %913 = vmatprep.subr.bf16.mxu0 0
  %914 = vmatpush2.bf16.msra.mxu0 0
  %915 = vmatprep.subr.bf16.mxu0 0
  %916 = vmatpush2.bf16.msra.mxu0 0
  %917 = vmatprep.subr.bf16.mxu0 0
  %918 = vmatpush2.bf16.msra.mxu0 0
  %919 = vmatprep.subr.bf16.mxu0 0
  %920 = vmatpush2.bf16.msra.mxu0 0
  %921 = vmatprep.subr.bf16.mxu0 0
  %922 = vmatpush2.bf16.msra.mxu0 0
  %923 = vmatprep.mubr.bf16.mxu0 0
  %924 = vmatmul.mubr.bf16.gmra.mxu0 %v890
  %v925 = vpop.f32.mrf.mxu0
  %v926 = vadd.f32 0.0, %v925
  %v927 = vpop.f32.mrf.mxu0
  %v928 = vadd.f32 0.0, %v927
  %v929 = vpop.f32.mrf.mxu0
  %v930 = vpop.f32.mrf.mxu0
  %931 = vdwg.mxu0
  %932 = vmatprep.subr.bf16.mxu0 %v483
  %933 = vmatpush1.bf16.msra.mxu0 %v482
  %934 = vmatprep.subr.bf16.mxu0 %v479
  %935 = vmatpush1.bf16.msra.mxu0 %v478
  %936 = vmatprep.subr.bf16.mxu0 %v475
  %937 = vmatpush1.bf16.msra.mxu0 %v474
  %938 = vmatprep.subr.bf16.mxu0 %v471
  %939 = vmatpush1.bf16.msra.mxu0 %v470
  %940 = vmatprep.subr.bf16.mxu0 %v467
  %941 = vmatpush1.bf16.msra.mxu0 %v466
  %942 = vmatprep.subr.bf16.mxu0 %v463
  %943 = vmatpush1.bf16.msra.mxu0 %v462
  %944 = vmatprep.subr.bf16.mxu0 %v459
  %945 = vmatpush1.bf16.msra.mxu0 %v458
  %946 = vmatprep.subr.bf16.mxu0 %v455
  %947 = vmatpush1.bf16.msra.mxu0 %v454
  %948 = vmatprep.subr.bf16.mxu0 0
  %949 = vmatpush2.bf16.msra.mxu0 0
  %950 = vmatprep.subr.bf16.mxu0 0
  %951 = vmatpush2.bf16.msra.mxu0 0
  %952 = vmatprep.subr.bf16.mxu0 0
  %953 = vmatpush2.bf16.msra.mxu0 0
  %954 = vmatprep.subr.bf16.mxu0 0
  %955 = vmatpush2.bf16.msra.mxu0 0
  %956 = vmatprep.subr.bf16.mxu0 0
  %957 = vmatpush2.bf16.msra.mxu0 0
  %958 = vmatprep.subr.bf16.mxu0 0
  %959 = vmatpush2.bf16.msra.mxu0 0
  %960 = vmatprep.subr.bf16.mxu0 0
  %961 = vmatpush2.bf16.msra.mxu0 0
  %962 = vmatprep.subr.bf16.mxu0 0
  %963 = vmatpush2.bf16.msra.mxu0 0
  %964 = vmatprep.mubr.bf16.mxu0 0
  %965 = vmatmul.mubr.bf16.gmra.mxu0 %v890
  %v966 = vpop.f32.mrf.mxu0
  %v967 = vadd.f32 0.0, %v966
  %v968 = vpop.f32.mrf.mxu0
  %v969 = vadd.f32 0.0, %v968
  %v970 = vpop.f32.mrf.mxu0
  %v971 = vpop.f32.mrf.mxu0
  %972 = vdwg.mxu0
  %v973 = vadd.f32 %v886, %v926
  %v974 = vadd.f32 %v887, %v928
  %v975 = vadd.f32 %v888, %v967
  %v976 = vadd.f32 %v889, %v969
  %v977 = vxor.u32 %v973, 2147483648
  %v978 = vxor.u32 %v974, 2147483648
  %v979 = vxor.u32 %v975, 2147483648
  %v980 = vxor.u32 %v976, 2147483648
  %v981 = vmul.f32 %v977, 1.442695
  %v982 = vpow.pop %v981
  %v983 = vmul.f32 %v978, 1.442695
  %v984 = vpow.pop %v983
  %v985 = vmul.f32 %v979, 1.442695
  %v986 = vpow.pop %v985
  %v987 = vmul.f32 %v980, 1.442695
  %v988 = vpow.pop %v987
  %v989 = vadd.f32 %v982, 1.0
  %v990 = vadd.f32 %v984, 1.0
  %v991 = vadd.f32 %v986, 1.0
  %v992 = vadd.f32 %v988, 1.0
  %v993 = vrcp.pop %v989
  %v994 = vmul.f32 1.0, %v993
  %v995 = vrcp.pop %v990
  %v996 = vmul.f32 1.0, %v995
  %v997 = vrcp.pop %v991
  %v998 = vmul.f32 1.0, %v997
  %v999 = vrcp.pop %v992
  %v1000 = vmul.f32 1.0, %v999
  %v1001 = vmul.f32 %v998, 2.0
  %v1002 = vsub.f32 %v1001, 1.0
  %v1003 = vmul.f32 %v996, %v880
  %v1004 = vmul.f32 %v994, %v1002
  %v1005 = vadd.f32 %v1003, %v1004
  %v1006 = vtanh.pop %v1005
  %v1007 = vmul.f32 %v1000, %v1006
  %s1008 = smul.u32 4, 4
  %s1009 = smul.addr %s1008, 8
  %s1010 = scalar_lea.vmem [#allocation2], %s1009
  %v1011 = vld [vmem:[%s1010] sm:$0xff]
  %v1012 = vld [vmem:[%s1010 + $0x8] sm:$0xff]
  %v1013 = vld [vmem:[%s1010 + $0x10] sm:$0xff]
  %v1014 = vld [vmem:[%s1010 + $0x18] sm:$0xff]
  %v1015 = vpack.c.bf16 %v1007, %v1007
  %1016 = vmatprep.subr.bf16.mxu0 %v481
  %1017 = vmatpush1.bf16.msra.mxu0 %v480
  %1018 = vmatprep.subr.bf16.mxu0 %v477
  %1019 = vmatpush1.bf16.msra.mxu0 %v476
  %1020 = vmatprep.subr.bf16.mxu0 %v473
  %1021 = vmatpush1.bf16.msra.mxu0 %v472
  %1022 = vmatprep.subr.bf16.mxu0 %v469
  %1023 = vmatpush1.bf16.msra.mxu0 %v468
  %1024 = vmatprep.subr.bf16.mxu0 %v465
  %1025 = vmatpush1.bf16.msra.mxu0 %v464
  %1026 = vmatprep.subr.bf16.mxu0 %v461
  %1027 = vmatpush1.bf16.msra.mxu0 %v460
  %1028 = vmatprep.subr.bf16.mxu0 %v457
  %1029 = vmatpush1.bf16.msra.mxu0 %v456
  %1030 = vmatprep.subr.bf16.mxu0 %v453
  %1031 = vmatpush1.bf16.msra.mxu0 %v452
  %1032 = vmatprep.subr.bf16.mxu0 0
  %1033 = vmatpush2.bf16.msra.mxu0 0
  %1034 = vmatprep.subr.bf16.mxu0 0
  %1035 = vmatpush2.bf16.msra.mxu0 0
  %1036 = vmatprep.subr.bf16.mxu0 0
  %1037 = vmatpush2.bf16.msra.mxu0 0
  %1038 = vmatprep.subr.bf16.mxu0 0
  %1039 = vmatpush2.bf16.msra.mxu0 0
  %1040 = vmatprep.subr.bf16.mxu0 0
  %1041 = vmatpush2.bf16.msra.mxu0 0
  %1042 = vmatprep.subr.bf16.mxu0 0
  %1043 = vmatpush2.bf16.msra.mxu0 0
  %1044 = vmatprep.subr.bf16.mxu0 0
  %1045 = vmatpush2.bf16.msra.mxu0 0
  %1046 = vmatprep.subr.bf16.mxu0 0
  %1047 = vmatpush2.bf16.msra.mxu0 0
  %1048 = vmatprep.mubr.bf16.mxu0 0
  %1049 = vmatmul.mubr.bf16.gmra.mxu0 %v1015
  %v1050 = vpop.f32.mrf.mxu0
  %v1051 = vadd.f32 0.0, %v1050
  %v1052 = vpop.f32.mrf.mxu0
  %v1053 = vadd.f32 0.0, %v1052
  %v1054 = vpop.f32.mrf.mxu0
  %v1055 = vpop.f32.mrf.mxu0
  %1056 = vdwg.mxu0
  %1057 = vmatprep.subr.bf16.mxu0 %v483
  %1058 = vmatpush1.bf16.msra.mxu0 %v482
  %1059 = vmatprep.subr.bf16.mxu0 %v479
  %1060 = vmatpush1.bf16.msra.mxu0 %v478
  %1061 = vmatprep.subr.bf16.mxu0 %v475
  %1062 = vmatpush1.bf16.msra.mxu0 %v474
  %1063 = vmatprep.subr.bf16.mxu0 %v471
  %1064 = vmatpush1.bf16.msra.mxu0 %v470
  %1065 = vmatprep.subr.bf16.mxu0 %v467
  %1066 = vmatpush1.bf16.msra.mxu0 %v466
  %1067 = vmatprep.subr.bf16.mxu0 %v463
  %1068 = vmatpush1.bf16.msra.mxu0 %v462
  %1069 = vmatprep.subr.bf16.mxu0 %v459
  %1070 = vmatpush1.bf16.msra.mxu0 %v458
  %1071 = vmatprep.subr.bf16.mxu0 %v455
  %1072 = vmatpush1.bf16.msra.mxu0 %v454
  %1073 = vmatprep.subr.bf16.mxu0 0
  %1074 = vmatpush2.bf16.msra.mxu0 0
  %1075 = vmatprep.subr.bf16.mxu0 0
  %1076 = vmatpush2.bf16.msra.mxu0 0
  %1077 = vmatprep.subr.bf16.mxu0 0
  %1078 = vmatpush2.bf16.msra.mxu0 0
  %1079 = vmatprep.subr.bf16.mxu0 0
  %1080 = vmatpush2.bf16.msra.mxu0 0
  %1081 = vmatprep.subr.bf16.mxu0 0
  %1082 = vmatpush2.bf16.msra.mxu0 0
  %1083 = vmatprep.subr.bf16.mxu0 0
  %1084 = vmatpush2.bf16.msra.mxu0 0
  %1085 = vmatprep.subr.bf16.mxu0 0
  %1086 = vmatpush2.bf16.msra.mxu0 0
  %1087 = vmatprep.subr.bf16.mxu0 0
  %1088 = vmatpush2.bf16.msra.mxu0 0
  %1089 = vmatprep.mubr.bf16.mxu0 0
  %1090 = vmatmul.mubr.bf16.gmra.mxu0 %v1015
  %v1091 = vpop.f32.mrf.mxu0
  %v1092 = vadd.f32 0.0, %v1091
  %v1093 = vpop.f32.mrf.mxu0
  %v1094 = vadd.f32 0.0, %v1093
  %v1095 = vpop.f32.mrf.mxu0
  %v1096 = vpop.f32.mrf.mxu0
  %1097 = vdwg.mxu0
  %v1098 = vadd.f32 %v1011, %v1051
  %v1099 = vadd.f32 %v1012, %v1053
  %v1100 = vadd.f32 %v1013, %v1092
  %v1101 = vadd.f32 %v1014, %v1094
  %v1102 = vxor.u32 %v1098, 2147483648
  %v1103 = vxor.u32 %v1099, 2147483648
  %v1104 = vxor.u32 %v1100, 2147483648
  %v1105 = vxor.u32 %v1101, 2147483648
  %v1106 = vmul.f32 %v1102, 1.442695
  %v1107 = vpow.pop %v1106
  %v1108 = vmul.f32 %v1103, 1.442695
  %v1109 = vpow.pop %v1108
  %v1110 = vmul.f32 %v1104, 1.442695
  %v1111 = vpow.pop %v1110
  %v1112 = vmul.f32 %v1105, 1.442695
  %v1113 = vpow.pop %v1112
  %v1114 = vadd.f32 %v1107, 1.0
  %v1115 = vadd.f32 %v1109, 1.0
  %v1116 = vadd.f32 %v1111, 1.0
  %v1117 = vadd.f32 %v1113, 1.0
  %v1118 = vrcp.pop %v1114
  %v1119 = vmul.f32 1.0, %v1118
  %v1120 = vrcp.pop %v1115
  %v1121 = vmul.f32 1.0, %v1120
  %v1122 = vrcp.pop %v1116
  %v1123 = vmul.f32 1.0, %v1122
  %v1124 = vrcp.pop %v1117
  %v1125 = vmul.f32 1.0, %v1124
  %v1126 = vmul.f32 %v1123, 2.0
  %v1127 = vsub.f32 %v1126, 1.0
  %v1128 = vmul.f32 %v1121, %v1005
  %v1129 = vmul.f32 %v1119, %v1127
  %v1130 = vadd.f32 %v1128, %v1129
  %v1131 = vtanh.pop %v1130
  %v1132 = vmul.f32 %v1125, %v1131
  %s1133 = smul.u32 5, 4
  %s1134 = smul.addr %s1133, 8
  %s1135 = scalar_lea.vmem [#allocation2], %s1134
  %v1136 = vld [vmem:[%s1135] sm:$0xff]
  %v1137 = vld [vmem:[%s1135 + $0x8] sm:$0xff]
  %v1138 = vld [vmem:[%s1135 + $0x10] sm:$0xff]
  %v1139 = vld [vmem:[%s1135 + $0x18] sm:$0xff]
  %v1140 = vpack.c.bf16 %v1132, %v1132
  %1141 = vmatprep.subr.bf16.mxu0 %v481
  %1142 = vmatpush1.bf16.msra.mxu0 %v480
  %1143 = vmatprep.subr.bf16.mxu0 %v477
  %1144 = vmatpush1.bf16.msra.mxu0 %v476
  %1145 = vmatprep.subr.bf16.mxu0 %v473
  %1146 = vmatpush1.bf16.msra.mxu0 %v472
  %1147 = vmatprep.subr.bf16.mxu0 %v469
  %1148 = vmatpush1.bf16.msra.mxu0 %v468
  %1149 = vmatprep.subr.bf16.mxu0 %v465
  %1150 = vmatpush1.bf16.msra.mxu0 %v464
  %1151 = vmatprep.subr.bf16.mxu0 %v461
  %1152 = vmatpush1.bf16.msra.mxu0 %v460
  %1153 = vmatprep.subr.bf16.mxu0 %v457
  %1154 = vmatpush1.bf16.msra.mxu0 %v456
  %1155 = vmatprep.subr.bf16.mxu0 %v453
  %1156 = vmatpush1.bf16.msra.mxu0 %v452
  %1157 = vmatprep.subr.bf16.mxu0 0
  %1158 = vmatpush2.bf16.msra.mxu0 0
  %1159 = vmatprep.subr.bf16.mxu0 0
  %1160 = vmatpush2.bf16.msra.mxu0 0
  %1161 = vmatprep.subr.bf16.mxu0 0
  %1162 = vmatpush2.bf16.msra.mxu0 0
  %1163 = vmatprep.subr.bf16.mxu0 0
  %1164 = vmatpush2.bf16.msra.mxu0 0
  %1165 = vmatprep.subr.bf16.mxu0 0
  %1166 = vmatpush2.bf16.msra.mxu0 0
  %1167 = vmatprep.subr.bf16.mxu0 0
  %1168 = vmatpush2.bf16.msra.mxu0 0
  %1169 = vmatprep.subr.bf16.mxu0 0
  %1170 = vmatpush2.bf16.msra.mxu0 0
  %1171 = vmatprep.subr.bf16.mxu0 0
  %1172 = vmatpush2.bf16.msra.mxu0 0
  %1173 = vmatprep.mubr.bf16.mxu0 0
  %1174 = vmatmul.mubr.bf16.gmra.mxu0 %v1140
  %v1175 = vpop.f32.mrf.mxu0
  %v1176 = vadd.f32 0.0, %v1175
  %v1177 = vpop.f32.mrf.mxu0
  %v1178 = vadd.f32 0.0, %v1177
  %v1179 = vpop.f32.mrf.mxu0
  %v1180 = vpop.f32.mrf.mxu0
  %1181 = vdwg.mxu0
  %1182 = vmatprep.subr.bf16.mxu0 %v483
  %1183 = vmatpush1.bf16.msra.mxu0 %v482
  %1184 = vmatprep.subr.bf16.mxu0 %v479
  %1185 = vmatpush1.bf16.msra.mxu0 %v478
  %1186 = vmatprep.subr.bf16.mxu0 %v475
  %1187 = vmatpush1.bf16.msra.mxu0 %v474
  %1188 = vmatprep.subr.bf16.mxu0 %v471
  %1189 = vmatpush1.bf16.msra.mxu0 %v470
  %1190 = vmatprep.subr.bf16.mxu0 %v467
  %1191 = vmatpush1.bf16.msra.mxu0 %v466
  %1192 = vmatprep.subr.bf16.mxu0 %v463
  %1193 = vmatpush1.bf16.msra.mxu0 %v462
  %1194 = vmatprep.subr.bf16.mxu0 %v459
  %1195 = vmatpush1.bf16.msra.mxu0 %v458
  %1196 = vmatprep.subr.bf16.mxu0 %v455
  %1197 = vmatpush1.bf16.msra.mxu0 %v454
  %1198 = vmatprep.subr.bf16.mxu0 0
  %1199 = vmatpush2.bf16.msra.mxu0 0
  %1200 = vmatprep.subr.bf16.mxu0 0
  %1201 = vmatpush2.bf16.msra.mxu0 0
  %1202 = vmatprep.subr.bf16.mxu0 0
  %1203 = vmatpush2.bf16.msra.mxu0 0
  %1204 = vmatprep.subr.bf16.mxu0 0
  %1205 = vmatpush2.bf16.msra.mxu0 0
  %1206 = vmatprep.subr.bf16.mxu0 0
  %1207 = vmatpush2.bf16.msra.mxu0 0
  %1208 = vmatprep.subr.bf16.mxu0 0
  %1209 = vmatpush2.bf16.msra.mxu0 0
  %1210 = vmatprep.subr.bf16.mxu0 0
  %1211 = vmatpush2.bf16.msra.mxu0 0
  %1212 = vmatprep.subr.bf16.mxu0 0
  %1213 = vmatpush2.bf16.msra.mxu0 0
  %1214 = vmatprep.mubr.bf16.mxu0 0
  %1215 = vmatmul.mubr.bf16.gmra.mxu0 %v1140
  %v1216 = vpop.f32.mrf.mxu0
  %v1217 = vadd.f32 0.0, %v1216
  %v1218 = vpop.f32.mrf.mxu0
  %v1219 = vadd.f32 0.0, %v1218
  %v1220 = vpop.f32.mrf.mxu0
  %v1221 = vpop.f32.mrf.mxu0
  %1222 = vdwg.mxu0
  %v1223 = vadd.f32 %v1136, %v1176
  %v1224 = vadd.f32 %v1137, %v1178
  %v1225 = vadd.f32 %v1138, %v1217
  %v1226 = vadd.f32 %v1139, %v1219
  %v1227 = vxor.u32 %v1223, 2147483648
  %v1228 = vxor.u32 %v1224, 2147483648
  %v1229 = vxor.u32 %v1225, 2147483648
  %v1230 = vxor.u32 %v1226, 2147483648
  %v1231 = vmul.f32 %v1227, 1.442695
  %v1232 = vpow.pop %v1231
  %v1233 = vmul.f32 %v1228, 1.442695
  %v1234 = vpow.pop %v1233
  %v1235 = vmul.f32 %v1229, 1.442695
  %v1236 = vpow.pop %v1235
  %v1237 = vmul.f32 %v1230, 1.442695
  %v1238 = vpow.pop %v1237
  %v1239 = vadd.f32 %v1232, 1.0
  %v1240 = vadd.f32 %v1234, 1.0
  %v1241 = vadd.f32 %v1236, 1.0
  %v1242 = vadd.f32 %v1238, 1.0
  %v1243 = vrcp.pop %v1239
  %v1244 = vmul.f32 1.0, %v1243
  %v1245 = vrcp.pop %v1240
  %v1246 = vmul.f32 1.0, %v1245
  %v1247 = vrcp.pop %v1241
  %v1248 = vmul.f32 1.0, %v1247
  %v1249 = vrcp.pop %v1242
  %v1250 = vmul.f32 1.0, %v1249
  %v1251 = vmul.f32 %v1248, 2.0
  %v1252 = vsub.f32 %v1251, 1.0
  %v1253 = vmul.f32 %v1246, %v1130
  %v1254 = vmul.f32 %v1244, %v1252
  %v1255 = vadd.f32 %v1253, %v1254
  %v1256 = vtanh.pop %v1255
  %v1257 = vmul.f32 %v1250, %v1256
  %s1258 = smul.u32 6, 4
  %s1259 = smul.addr %s1258, 8
  %s1260 = scalar_lea.vmem [#allocation2], %s1259
  %v1261 = vld [vmem:[%s1260] sm:$0xff]
  %v1262 = vld [vmem:[%s1260 + $0x8] sm:$0xff]
  %v1263 = vld [vmem:[%s1260 + $0x10] sm:$0xff]
  %v1264 = vld [vmem:[%s1260 + $0x18] sm:$0xff]
  %v1265 = vpack.c.bf16 %v1257, %v1257
  %1266 = vmatprep.subr.bf16.mxu0 %v481
  %1267 = vmatpush1.bf16.msra.mxu0 %v480
  %1268 = vmatprep.subr.bf16.mxu0 %v477
  %1269 = vmatpush1.bf16.msra.mxu0 %v476
  %1270 = vmatprep.subr.bf16.mxu0 %v473
  %1271 = vmatpush1.bf16.msra.mxu0 %v472
  %1272 = vmatprep.subr.bf16.mxu0 %v469
  %1273 = vmatpush1.bf16.msra.mxu0 %v468
  %1274 = vmatprep.subr.bf16.mxu0 %v465
  %1275 = vmatpush1.bf16.msra.mxu0 %v464
  %1276 = vmatprep.subr.bf16.mxu0 %v461
  %1277 = vmatpush1.bf16.msra.mxu0 %v460
  %1278 = vmatprep.subr.bf16.mxu0 %v457
  %1279 = vmatpush1.bf16.msra.mxu0 %v456
  %1280 = vmatprep.subr.bf16.mxu0 %v453
  %1281 = vmatpush1.bf16.msra.mxu0 %v452
  %1282 = vmatprep.subr.bf16.mxu0 0
  %1283 = vmatpush2.bf16.msra.mxu0 0
  %1284 = vmatprep.subr.bf16.mxu0 0
  %1285 = vmatpush2.bf16.msra.mxu0 0
  %1286 = vmatprep.subr.bf16.mxu0 0
  %1287 = vmatpush2.bf16.msra.mxu0 0
  %1288 = vmatprep.subr.bf16.mxu0 0
  %1289 = vmatpush2.bf16.msra.mxu0 0
  %1290 = vmatprep.subr.bf16.mxu0 0
  %1291 = vmatpush2.bf16.msra.mxu0 0
  %1292 = vmatprep.subr.bf16.mxu0 0
  %1293 = vmatpush2.bf16.msra.mxu0 0
  %1294 = vmatprep.subr.bf16.mxu0 0
  %1295 = vmatpush2.bf16.msra.mxu0 0
  %1296 = vmatprep.subr.bf16.mxu0 0
  %1297 = vmatpush2.bf16.msra.mxu0 0
  %1298 = vmatprep.mubr.bf16.mxu0 0
  %1299 = vmatmul.mubr.bf16.gmra.mxu0 %v1265
  %v1300 = vpop.f32.mrf.mxu0
  %v1301 = vadd.f32 0.0, %v1300
  %v1302 = vpop.f32.mrf.mxu0
  %v1303 = vadd.f32 0.0, %v1302
  %v1304 = vpop.f32.mrf.mxu0
  %v1305 = vpop.f32.mrf.mxu0
  %1306 = vdwg.mxu0
  %1307 = vmatprep.subr.bf16.mxu0 %v483
  %1308 = vmatpush1.bf16.msra.mxu0 %v482
  %1309 = vmatprep.subr.bf16.mxu0 %v479
  %1310 = vmatpush1.bf16.msra.mxu0 %v478
  %1311 = vmatprep.subr.bf16.mxu0 %v475
  %1312 = vmatpush1.bf16.msra.mxu0 %v474
  %1313 = vmatprep.subr.bf16.mxu0 %v471
  %1314 = vmatpush1.bf16.msra.mxu0 %v470
  %1315 = vmatprep.subr.bf16.mxu0 %v467
  %1316 = vmatpush1.bf16.msra.mxu0 %v466
  %1317 = vmatprep.subr.bf16.mxu0 %v463
  %1318 = vmatpush1.bf16.msra.mxu0 %v462
  %1319 = vmatprep.subr.bf16.mxu0 %v459
  %1320 = vmatpush1.bf16.msra.mxu0 %v458
  %1321 = vmatprep.subr.bf16.mxu0 %v455
  %1322 = vmatpush1.bf16.msra.mxu0 %v454
  %1323 = vmatprep.subr.bf16.mxu0 0
  %1324 = vmatpush2.bf16.msra.mxu0 0
  %1325 = vmatprep.subr.bf16.mxu0 0
  %1326 = vmatpush2.bf16.msra.mxu0 0
  %1327 = vmatprep.subr.bf16.mxu0 0
  %1328 = vmatpush2.bf16.msra.mxu0 0
  %1329 = vmatprep.subr.bf16.mxu0 0
  %1330 = vmatpush2.bf16.msra.mxu0 0
  %1331 = vmatprep.subr.bf16.mxu0 0
  %1332 = vmatpush2.bf16.msra.mxu0 0
  %1333 = vmatprep.subr.bf16.mxu0 0
  %1334 = vmatpush2.bf16.msra.mxu0 0
  %1335 = vmatprep.subr.bf16.mxu0 0
  %1336 = vmatpush2.bf16.msra.mxu0 0
  %1337 = vmatprep.subr.bf16.mxu0 0
  %1338 = vmatpush2.bf16.msra.mxu0 0
  %1339 = vmatprep.mubr.bf16.mxu0 0
  %1340 = vmatmul.mubr.bf16.gmra.mxu0 %v1265
  %v1341 = vpop.f32.mrf.mxu0
  %v1342 = vadd.f32 0.0, %v1341
  %v1343 = vpop.f32.mrf.mxu0
  %v1344 = vadd.f32 0.0, %v1343
  %v1345 = vpop.f32.mrf.mxu0
  %v1346 = vpop.f32.mrf.mxu0
  %1347 = vdwg.mxu0
  %v1348 = vadd.f32 %v1261, %v1301
  %v1349 = vadd.f32 %v1262, %v1303
  %v1350 = vadd.f32 %v1263, %v1342
  %v1351 = vadd.f32 %v1264, %v1344
  %v1352 = vxor.u32 %v1348, 2147483648
  %v1353 = vxor.u32 %v1349, 2147483648
  %v1354 = vxor.u32 %v1350, 2147483648
  %v1355 = vxor.u32 %v1351, 2147483648
  %v1356 = vmul.f32 %v1352, 1.442695
  %v1357 = vpow.pop %v1356
  %v1358 = vmul.f32 %v1353, 1.442695
  %v1359 = vpow.pop %v1358
  %v1360 = vmul.f32 %v1354, 1.442695
  %v1361 = vpow.pop %v1360
  %v1362 = vmul.f32 %v1355, 1.442695
  %v1363 = vpow.pop %v1362
  %v1364 = vadd.f32 %v1357, 1.0
  %v1365 = vadd.f32 %v1359, 1.0
  %v1366 = vadd.f32 %v1361, 1.0
  %v1367 = vadd.f32 %v1363, 1.0
  %v1368 = vrcp.pop %v1364
  %v1369 = vmul.f32 1.0, %v1368
  %v1370 = vrcp.pop %v1365
  %v1371 = vmul.f32 1.0, %v1370
  %v1372 = vrcp.pop %v1366
  %v1373 = vmul.f32 1.0, %v1372
  %v1374 = vrcp.pop %v1367
  %v1375 = vmul.f32 1.0, %v1374
  %v1376 = vmul.f32 %v1373, 2.0
  %v1377 = vsub.f32 %v1376, 1.0
  %v1378 = vmul.f32 %v1371, %v1255
  %v1379 = vmul.f32 %v1369, %v1377
  %v1380 = vadd.f32 %v1378, %v1379
  %v1381 = vtanh.pop %v1380
  %v1382 = vmul.f32 %v1375, %v1381
  %s1383 = smul.u32 7, 4
  %s1384 = smul.addr %s1383, 8
  %s1385 = scalar_lea.vmem [#allocation2], %s1384
  %v1386 = vld [vmem:[%s1385] sm:$0xff]
  %v1387 = vld [vmem:[%s1385 + $0x8] sm:$0xff]
  %v1388 = vld [vmem:[%s1385 + $0x10] sm:$0xff]
  %v1389 = vld [vmem:[%s1385 + $0x18] sm:$0xff]
  %v1390 = vpack.c.bf16 %v1382, %v1382
  %1391 = vmatprep.subr.bf16.mxu0 %v481
  %1392 = vmatpush1.bf16.msra.mxu0 %v480
  %1393 = vmatprep.subr.bf16.mxu0 %v477
  %1394 = vmatpush1.bf16.msra.mxu0 %v476
  %1395 = vmatprep.subr.bf16.mxu0 %v473
  %1396 = vmatpush1.bf16.msra.mxu0 %v472
  %1397 = vmatprep.subr.bf16.mxu0 %v469
  %1398 = vmatpush1.bf16.msra.mxu0 %v468
  %1399 = vmatprep.subr.bf16.mxu0 %v465
  %1400 = vmatpush1.bf16.msra.mxu0 %v464
  %1401 = vmatprep.subr.bf16.mxu0 %v461
  %1402 = vmatpush1.bf16.msra.mxu0 %v460
  %1403 = vmatprep.subr.bf16.mxu0 %v457
  %1404 = vmatpush1.bf16.msra.mxu0 %v456
  %1405 = vmatprep.subr.bf16.mxu0 %v453
  %1406 = vmatpush1.bf16.msra.mxu0 %v452
  %1407 = vmatprep.subr.bf16.mxu0 0
  %1408 = vmatpush2.bf16.msra.mxu0 0
  %1409 = vmatprep.subr.bf16.mxu0 0
  %1410 = vmatpush2.bf16.msra.mxu0 0
  %1411 = vmatprep.subr.bf16.mxu0 0
  %1412 = vmatpush2.bf16.msra.mxu0 0
  %1413 = vmatprep.subr.bf16.mxu0 0
  %1414 = vmatpush2.bf16.msra.mxu0 0
  %1415 = vmatprep.subr.bf16.mxu0 0
  %1416 = vmatpush2.bf16.msra.mxu0 0
  %1417 = vmatprep.subr.bf16.mxu0 0
  %1418 = vmatpush2.bf16.msra.mxu0 0
  %1419 = vmatprep.subr.bf16.mxu0 0
  %1420 = vmatpush2.bf16.msra.mxu0 0
  %1421 = vmatprep.subr.bf16.mxu0 0
  %1422 = vmatpush2.bf16.msra.mxu0 0
  %1423 = vmatprep.mubr.bf16.mxu0 0
  %1424 = vmatmul.mubr.bf16.gmra.mxu0 %v1390
  %v1425 = vpop.f32.mrf.mxu0
  %v1426 = vadd.f32 0.0, %v1425
  %v1427 = vpop.f32.mrf.mxu0
  %v1428 = vadd.f32 0.0, %v1427
  %v1429 = vpop.f32.mrf.mxu0
  %v1430 = vpop.f32.mrf.mxu0
  %1431 = vdwg.mxu0
  %1432 = vmatprep.subr.bf16.mxu0 %v483
  %1433 = vmatpush1.bf16.msra.mxu0 %v482
  %1434 = vmatprep.subr.bf16.mxu0 %v479
  %1435 = vmatpush1.bf16.msra.mxu0 %v478
  %1436 = vmatprep.subr.bf16.mxu0 %v475
  %1437 = vmatpush1.bf16.msra.mxu0 %v474
  %1438 = vmatprep.subr.bf16.mxu0 %v471
  %1439 = vmatpush1.bf16.msra.mxu0 %v470
  %1440 = vmatprep.subr.bf16.mxu0 %v467
  %1441 = vmatpush1.bf16.msra.mxu0 %v466
  %1442 = vmatprep.subr.bf16.mxu0 %v463
  %1443 = vmatpush1.bf16.msra.mxu0 %v462
  %1444 = vmatprep.subr.bf16.mxu0 %v459
  %1445 = vmatpush1.bf16.msra.mxu0 %v458
  %1446 = vmatprep.subr.bf16.mxu0 %v455
  %1447 = vmatpush1.bf16.msra.mxu0 %v454
  %1448 = vmatprep.subr.bf16.mxu0 0
  %1449 = vmatpush2.bf16.msra.mxu0 0
  %1450 = vmatprep.subr.bf16.mxu0 0
  %1451 = vmatpush2.bf16.msra.mxu0 0
  %1452 = vmatprep.subr.bf16.mxu0 0
  %1453 = vmatpush2.bf16.msra.mxu0 0
  %1454 = vmatprep.subr.bf16.mxu0 0
  %1455 = vmatpush2.bf16.msra.mxu0 0
  %1456 = vmatprep.subr.bf16.mxu0 0
  %1457 = vmatpush2.bf16.msra.mxu0 0
  %1458 = vmatprep.subr.bf16.mxu0 0
  %1459 = vmatpush2.bf16.msra.mxu0 0
  %1460 = vmatprep.subr.bf16.mxu0 0
  %1461 = vmatpush2.bf16.msra.mxu0 0
  %1462 = vmatprep.subr.bf16.mxu0 0
  %1463 = vmatpush2.bf16.msra.mxu0 0
  %1464 = vmatprep.mubr.bf16.mxu0 0
  %1465 = vmatmul.mubr.bf16.gmra.mxu0 %v1390
  %v1466 = vpop.f32.mrf.mxu0
  %v1467 = vadd.f32 0.0, %v1466
  %v1468 = vpop.f32.mrf.mxu0
  %v1469 = vadd.f32 0.0, %v1468
  %v1470 = vpop.f32.mrf.mxu0
  %v1471 = vpop.f32.mrf.mxu0
  %1472 = vdwg.mxu0
  %v1473 = vadd.f32 %v1386, %v1426
  %v1474 = vadd.f32 %v1387, %v1428
  %v1475 = vadd.f32 %v1388, %v1467
  %v1476 = vadd.f32 %v1389, %v1469
  %v1477 = vxor.u32 %v1473, 2147483648
  %v1478 = vxor.u32 %v1474, 2147483648
  %v1479 = vxor.u32 %v1475, 2147483648
  %v1480 = vxor.u32 %v1476, 2147483648
  %v1481 = vmul.f32 %v1477, 1.442695
  %v1482 = vpow.pop %v1481
  %v1483 = vmul.f32 %v1478, 1.442695
  %v1484 = vpow.pop %v1483
  %v1485 = vmul.f32 %v1479, 1.442695
  %v1486 = vpow.pop %v1485
  %v1487 = vmul.f32 %v1480, 1.442695
  %v1488 = vpow.pop %v1487
  %v1489 = vadd.f32 %v1482, 1.0
  %v1490 = vadd.f32 %v1484, 1.0
  %v1491 = vadd.f32 %v1486, 1.0
  %v1492 = vadd.f32 %v1488, 1.0
  %v1493 = vrcp.pop %v1489
  %v1494 = vmul.f32 1.0, %v1493
  %v1495 = vrcp.pop %v1490
  %v1496 = vmul.f32 1.0, %v1495
  %v1497 = vrcp.pop %v1491
  %v1498 = vmul.f32 1.0, %v1497
  %v1499 = vrcp.pop %v1492
  %v1500 = vmul.f32 1.0, %v1499
  %v1501 = vmul.f32 %v1498, 2.0
  %v1502 = vsub.f32 %v1501, 1.0
  %v1503 = vmul.f32 %v1496, %v1380
  %v1504 = vmul.f32 %v1494, %v1502
  %v1505 = vadd.f32 %v1503, %v1504
  %v1506 = vtanh.pop %v1505
  %v1507 = vmul.f32 %v1500, %v1506
  %v1509 = vlaneseq
  %v1510 = vshrl.u32 %v1509, 7
  %v1511 = vsub.s32 0, %v1510
  %v1512 = vrot.slane %v347, %v1511
  %v1514 = vmul.f32 %v1507, %v1512
  %1515 = vadd.xlane.f32.xlu0 %v1514
  %v1516 = vpop.xlane.xlu0 %1515
  %v1518 = vlaneseq
  %v1519 = vshrl.u32 %v1518, 7
  %v1520 = vsub.s32 0, %v1519
  %v1521 = vrot.slane %v348, %v1520
  %v1523 = vadd.f32 %v1516, %v1521
  %vm1524 = vcmask 7168
  %1525 = vst.msk [vmem:[%s6] sm:$0xff] %vm1524, %v1523
  // Predicated region
  $region26: #{ngram_eos_forward.1} parent=0 // pred_check
    _
  $region27: #{ngram_eos_forward.1} parent=0 // pred_check_branch
    %1527 = sbr.rel (0) target = $region29
  $region28: #{ngram_eos_forward.1} parent=0 // pred_region
    _
  $region29: #{ngram_eos_forward.1} parent=0 // pred_fallthru
    _
  // Predicated region
  $region30: #{ngram_eos_forward.1} parent=0 // pred_check
    _
  $region31: #{ngram_eos_forward.1} parent=0 // pred_check_branch
    %1529 = sbr.rel (0) target = $region33
  $region32: #{ngram_eos_forward.1} parent=0 // pred_region
    _
  $region33: #{ngram_eos_forward.1} parent=0 // pred_fallthru
    _

</llo_original>
